<compile_context>
chip_gen: v6e
topology: v6e:2x2x1
jax: 0.10.0
libtpu: 0.0.40
codegen_flags: <defaults>
</compile_context>

<pallas_src>
import jax
import jax.numpy as jnp
from jax.experimental import pallas as pl
from jax.experimental.pallas import tpu as pltpu


def _lstm_net_kernel(x_ref,      # (L*B, Cin)  bf16, time-major (row = t*B + b)
                     w_in_ref,   # (Cin, 8H)   bf16, fused fwd/bwd input->gate weights
                     b_in_ref,   # (1, 8H)     f32,  fused biases (b_ih + b_hh per dir)
                     w_hh_ref,   # (2H, 8H)    bf16, block-diag fwd/bwd hidden->gate
                     dir_ref,    # (B, 8H)     int32, 1 on forward-direction lanes
                     w_lin_ref,  # (2H, H)     bf16, Linear(2H->H) weight (transposed)
                     b_lin_ref,  # (1, H)      f32
                     o_ref,      # (B, H)      f32 output (max over time)
                     hpair):     # scratch (L*B, 2H) f32: [h_fwd(t) | h_bwd(t)] per time t
    LB, _ = x_ref.shape
    B, H = o_ref.shape
    L = LB // B
    H2 = 2 * H
    f32, bf16 = jnp.float32, jnp.bfloat16

    w_hh = w_hh_ref[...]                                   # bf16, hoisted load
    fwd_lanes = dir_ref[...] != 0                          # (B, 8H) bool, hoisted

    # ---- ONE fused input projection for both directions (single big MXU matmul) ----
    zx = jnp.dot(x_ref[...], w_in_ref[...],
                 preferred_element_type=f32) + b_in_ref[...]           # (L*B, 8H)

    # ---- interleaved fwd/bwd recurrence: one block-diag MXU matmul per step ---------
    h = jnp.zeros((B, H2), f32)        # [h_fwd | h_bwd]
    c = jnp.zeros((B, H2), f32)        # [c_fwd | c_bwd]
    for s in range(L):                 # fully unrolled: L is small & static
        zf = zx[s * B:(s + 1) * B, :]                      # fwd consumes input t = s
        zb = zx[(L - 1 - s) * B:(L - s) * B, :]            # bwd consumes input t = L-1-s
        zxt = jnp.where(fwd_lanes, zf, zb)                 # per-direction input term
        z = zxt + jnp.dot(h.astype(bf16), w_hh, preferred_element_type=f32)  # (B, 8H)
        # Gate-major layout: [i | f | g | o], each 2H wide = [fwd | bwd].
        i_g = jax.nn.sigmoid(z[:, 0:H2])
        f_g = jax.nn.sigmoid(z[:, H2:2 * H2])
        g_g = jnp.tanh(z[:, 2 * H2:3 * H2])
        o_g = jax.nn.sigmoid(z[:, 3 * H2:4 * H2])
        c = f_g * c + i_g * g_g
        h = o_g * jnp.tanh(c)
        # Store hidden states re-paired by *timestep* (stores are off the critical path).
        hpair[s * B:(s + 1) * B, 0:H] = h[:, 0:H]                       # h_fwd(t = s)
        hpair[(L - 1 - s) * B:(L - s) * B, H:H2] = h[:, H:H2]           # h_bwd(t = L-1-s)

    # ---- hoisted Linear(2H->H): ONE matmul over all timesteps, then max over time ---
    out_all = jnp.dot(hpair[...].astype(bf16), w_lin_ref[...],
                      preferred_element_type=f32) + b_lin_ref[...]      # (L*B, H)
    m = out_all[0:B, :]
    for t in range(1, L):
        m = jnp.maximum(m, out_all[t * B:(t + 1) * B, :])
    o_ref[...] = m


def _pack_gate_major(a_f, a_b, H):
    """[i,f,g,o] per direction (last axis 4H) -> [i_f i_b f_f f_b g_f g_b o_f o_b] (8H)."""
    parts = []
    for k in range(4):
        parts.append(a_f[..., k * H:(k + 1) * H])
        parts.append(a_b[..., k * H:(k + 1) * H])
    return jnp.concatenate(parts, axis=-1)


@jax.jit
def lstm_net_forward(x, params):
    """x: (B, Cin, L) float32 — same layout the PyTorch forward() receives."""
    B, Cin, L = x.shape
    H = params["whh_f"].shape[0]
    f32, bf16 = jnp.float32, jnp.bfloat16

    # Time-major, lane-dense 2D input slab (row = t*B + b); pre-cast to bf16.
    x2d = jnp.transpose(x, (2, 0, 1)).reshape(L * B, Cin).astype(bf16)

    # Fused / reordered weights — pure layout plumbing, done once under jit.
    w_in = _pack_gate_major(params["wih_f"], params["wih_b"], H).astype(bf16)   # (Cin, 8H)
    b_in = _pack_gate_major(params["b_f"], params["b_b"], H).astype(f32)        # (1, 8H)
    w_hh = jnp.concatenate(
        [_pack_gate_major(params["whh_f"], jnp.zeros_like(params["whh_b"]), H),
         _pack_gate_major(jnp.zeros_like(params["whh_f"]), params["whh_b"], H)],
        axis=0).astype(bf16)                                                    # (2H, 8H)
    w_lin = jnp.concatenate([params["wlin_f"], params["wlin_b"]],
                            axis=0).astype(bf16)                                # (2H, H)
    b_lin = params["blin"].astype(f32)                                          # (1, H)
    # 1 on forward-direction lanes inside each 2H gate group, tiled to (B, 8H).
    dir_mask = jnp.tile(
        jnp.concatenate([jnp.ones((1, H), jnp.int32), jnp.zeros((1, H), jnp.int32)],
                        axis=1),
        (B, 4))                                                                 # (B, 8H)

    operands = (x2d, w_in, b_in, w_hh, dir_mask, w_lin, b_lin)
    return pl.pallas_call(
        _lstm_net_kernel,
        out_shape=jax.ShapeDtypeStruct((B, H), jnp.float32),
        in_specs=[pl.BlockSpec(memory_space=pltpu.MemorySpace.VMEM)] * len(operands),
        out_specs=pl.BlockSpec(memory_space=pltpu.MemorySpace.VMEM),
        scratch_shapes=[pltpu.VMEM((L * B, 2 * H), jnp.float32)],
    )(*operands)


def init_params(key, Cin, H):
    """Deterministic init mirroring PyTorch's uniform(-1/sqrt(H), 1/sqrt(H))."""
    k = 1.0 / jnp.sqrt(jnp.float32(H))
    keys = jax.random.split(key, 12)
    u = lambda kk, shape: jax.random.uniform(kk, shape, jnp.float32, -k, k)
    return {
        # PyTorch stores weight_ih_l0 as (4H, Cin); we keep the transposed form.
        "wih_f": u(keys[0], (Cin, 4 * H)),
        "whh_f": u(keys[1], (H, 4 * H)),
        "b_f":   (u(keys[2], (1, 4 * H)) + u(keys[3], (1, 4 * H))),   # b_ih + b_hh
        "wih_b": u(keys[4], (Cin, 4 * H)),
        "whh_b": u(keys[5], (H, 4 * H)),
        "b_b":   (u(keys[6], (1, 4 * H)) + u(keys[7], (1, 4 * H))),
        # nn.Linear(2H, H): weight (H, 2H); stored as W.T split into fwd/bwd halves.
        "wlin_f": u(keys[8], (H, H)),
        "wlin_b": u(keys[9], (H, H)),
        "blin":   u(keys[10], (1, H)),
    }


def _reference_forward(x, params, matmul_dtype=jnp.float32):
    """Pure-JAX reference of the PyTorch semantics (eval mode).

    With matmul_dtype=bfloat16 it mirrors the kernel's mixed precision exactly
    (bf16 matmul operands, f32 accumulation, f32 elementwise)."""
    B, Cin, L = x.shape
    H = params["whh_f"].shape[0]
    xt = jnp.transpose(x, (0, 2, 1))  # (B, L, Cin)
    md = matmul_dtype

    def mm(a, w):
        return jnp.dot(a.astype(md), w.astype(md), preferred_element_type=jnp.float32)

    def cell(x_t, h, c, wih, whh, b):
        z = mm(x_t, wih) + mm(h, whh) + b
        i = jax.nn.sigmoid(z[:, 0:H])
        f = jax.nn.sigmoid(z[:, H:2 * H])
        g = jnp.tanh(z[:, 2 * H:3 * H])
        o = jax.nn.sigmoid(z[:, 3 * H:4 * H])
        c = f * c + i * g
        h = o * jnp.tanh(c)
        return h, c

    h = jnp.zeros((B, H), jnp.float32); c = jnp.zeros((B, H), jnp.float32)
    hf = []
    for t in range(L):
        h, c = cell(xt[:, t, :], h, c, params["wih_f"], params["whh_f"], params["b_f"])
        hf.append(h)
    h = jnp.zeros((B, H), jnp.float32); c = jnp.zeros((B, H), jnp.float32)
    hb = [None] * L
    for t in range(L - 1, -1, -1):
        h, c = cell(xt[:, t, :], h, c, params["wih_b"], params["whh_b"], params["b_b"])
        hb[t] = h
    outs = [mm(hf[t], params["wlin_f"]) + mm(hb[t], params["wlin_b"]) + params["blin"]
            for t in range(L)]
    out = jnp.stack(outs, axis=1)          # (B, L, H)
    return jnp.max(out, axis=1)            # (B, H)


if __name__ == "__main__":
    B, Cin, L, H = 2, 4, 8, 32

    key = jax.random.PRNGKey(0)
    k_x, k_p = jax.random.split(key)
    x = jax.random.normal(k_x, (B, Cin, L), jnp.float32)
    params = init_params(k_p, Cin, H)

    out = jax.block_until_ready(lstm_net_forward(x, params))
    assert out.shape == (B, H), out.shape

    # Tight check against a reference that uses the SAME mixed precision as the kernel
    # (validates gate order/reordering, block-diag fusion, bias handling, linear, max).
    ref_mixed = _reference_forward(x, params, matmul_dtype=jnp.bfloat16)
    assert jnp.allclose(out, ref_mixed, atol=5e-3, rtol=5e-3), \
        float(jnp.max(jnp.abs(out - ref_mixed)))

    # Loose sanity check against the full-f32 reference (bounds the bf16-matmul drift).
    ref_f32 = _reference_forward(x, params, matmul_dtype=jnp.float32)
    assert jnp.allclose(out, ref_f32, atol=2e-1, rtol=1e-1), \
        float(jnp.max(jnp.abs(out - ref_f32)))

    print("KERNEL_OK")
</pallas_src>

<mosaic_0001>
module attributes {stable_mosaic.version = 11 : i64} {
  func.func @_lstm_net_kernel(%arg0: memref<16x4xbf16, #tpu.memory_space<vmem>>, %arg1: memref<4x256xbf16, #tpu.memory_space<vmem>>, %arg2: memref<1x256xf32, #tpu.memory_space<vmem>>, %arg3: memref<64x256xbf16, #tpu.memory_space<vmem>>, %arg4: memref<2x256xi32, #tpu.memory_space<vmem>>, %arg5: memref<64x32xbf16, #tpu.memory_space<vmem>>, %arg6: memref<1x32xf32, #tpu.memory_space<vmem>>, %arg7: memref<2x32xf32, #tpu.memory_space<vmem>>, %arg8: memref<16x64xf32, #tpu.memory_space<vmem>>) attributes {dimension_semantics = [], scalar_prefetch = 0 : i64, scratch_operands = 1 : i64, tpu.core_type = #tpu.core_type<tc>} {
    %c0 = arith.constant 0 : index
    %c0_0 = arith.constant 0 : index
    %0 = vector.load %arg3[%c0, %c0_0] : memref<64x256xbf16, #tpu.memory_space<vmem>>, vector<64x256xbf16>
    %c0_1 = arith.constant 0 : index
    %c0_2 = arith.constant 0 : index
    %1 = vector.load %arg4[%c0_1, %c0_2] : memref<2x256xi32, #tpu.memory_space<vmem>>, vector<2x256xi32>
    %c0_i32 = arith.constant 0 : i32
    %2 = vector.broadcast %c0_i32 : i32 to vector<2x256xi32>
    %3 = arith.cmpi ne, %1, %2 : vector<2x256xi32>
    %c0_3 = arith.constant 0 : index
    %c0_4 = arith.constant 0 : index
    %4 = vector.load %arg0[%c0_3, %c0_4] : memref<16x4xbf16, #tpu.memory_space<vmem>>, vector<16x4xbf16>
    %c0_5 = arith.constant 0 : index
    %c0_6 = arith.constant 0 : index
    %5 = vector.load %arg1[%c0_5, %c0_6] : memref<4x256xbf16, #tpu.memory_space<vmem>>, vector<4x256xbf16>
    %cst = arith.constant dense<0.000000e+00> : vector<16x256xf32>
    %6 = tpu.matmul %4, %5, %cst {dimension_numbers = #tpu.dot_dimension_numbers<[1], [0], [0], [1], [0, 0, 1, 1], [], []>} : vector<16x4xbf16>, vector<4x256xbf16>, vector<16x256xf32> -> vector<16x256xf32>
    %c0_7 = arith.constant 0 : index
    %c0_8 = arith.constant 0 : index
    %7 = vector.load %arg2[%c0_7, %c0_8] : memref<1x256xf32, #tpu.memory_space<vmem>>, vector<1x256xf32>
    %8 = vector.broadcast %7 : vector<1x256xf32> to vector<16x256xf32>
    %9 = arith.addf %6, %8 : vector<16x256xf32>
    %cst_9 = arith.constant 0.000000e+00 : f32
    %10 = vector.broadcast %cst_9 : f32 to vector<2x64xf32>
    %cst_10 = arith.constant 0.000000e+00 : f32
    %11 = vector.broadcast %cst_10 : f32 to vector<2x64xf32>
    %12 = vector.extract_strided_slice %9 {offsets = [0, 0], sizes = [2, 256], strides = [1, 1]} : vector<16x256xf32> to vector<2x256xf32>
    %13 = vector.extract_strided_slice %9 {offsets = [14, 0], sizes = [2, 256], strides = [1, 1]} : vector<16x256xf32> to vector<2x256xf32>
    %14 = arith.select %3, %12, %13 : vector<2x256xi1>, vector<2x256xf32>
    %15 = arith.truncf %10 : vector<2x64xf32> to vector<2x64xbf16>
    %cst_11 = arith.constant dense<0.000000e+00> : vector<2x256xf32>
    %16 = tpu.matmul %15, %0, %cst_11 {dimension_numbers = #tpu.dot_dimension_numbers<[1], [0], [0], [1], [0, 0, 1, 1], [], []>} : vector<2x64xbf16>, vector<64x256xbf16>, vector<2x256xf32> -> vector<2x256xf32>
    %17 = arith.addf %14, %16 : vector<2x256xf32>
    %18 = vector.extract_strided_slice %17 {offsets = [0, 0], sizes = [2, 64], strides = [1, 1]} : vector<2x256xf32> to vector<2x64xf32>
    %19 = arith.negf %18 : vector<2x64xf32>
    %20 = math.exp %19 : vector<2x64xf32>
    %cst_12 = arith.constant 1.000000e+00 : f32
    %21 = vector.broadcast %cst_12 : f32 to vector<2x64xf32>
    %22 = arith.addf %21, %20 : vector<2x64xf32>
    %23 = arith.divf %21, %22 : vector<2x64xf32>
    %24 = vector.extract_strided_slice %17 {offsets = [0, 64], sizes = [2, 64], strides = [1, 1]} : vector<2x256xf32> to vector<2x64xf32>
    %25 = arith.negf %24 : vector<2x64xf32>
    %26 = math.exp %25 : vector<2x64xf32>
    %cst_13 = arith.constant 1.000000e+00 : f32
    %27 = vector.broadcast %cst_13 : f32 to vector<2x64xf32>
    %28 = arith.addf %27, %26 : vector<2x64xf32>
    %29 = arith.divf %27, %28 : vector<2x64xf32>
    %30 = vector.extract_strided_slice %17 {offsets = [0, 128], sizes = [2, 64], strides = [1, 1]} : vector<2x256xf32> to vector<2x64xf32>
    %31 = math.tanh %30 : vector<2x64xf32>
    %32 = vector.extract_strided_slice %17 {offsets = [0, 192], sizes = [2, 64], strides = [1, 1]} : vector<2x256xf32> to vector<2x64xf32>
    %33 = arith.negf %32 : vector<2x64xf32>
    %34 = math.exp %33 : vector<2x64xf32>
    %cst_14 = arith.constant 1.000000e+00 : f32
    %35 = vector.broadcast %cst_14 : f32 to vector<2x64xf32>
    %36 = arith.addf %35, %34 : vector<2x64xf32>
    %37 = arith.divf %35, %36 : vector<2x64xf32>
    %38 = arith.mulf %29, %11 : vector<2x64xf32>
    %39 = arith.mulf %23, %31 : vector<2x64xf32>
    %40 = arith.addf %38, %39 : vector<2x64xf32>
    %41 = math.tanh %40 : vector<2x64xf32>
    %42 = arith.mulf %37, %41 : vector<2x64xf32>
    %43 = vector.extract_strided_slice %42 {offsets = [0, 0], sizes = [2, 32], strides = [1, 1]} : vector<2x64xf32> to vector<2x32xf32>
    %c0_15 = arith.constant 0 : index
    %c0_16 = arith.constant 0 : index
    %44 = vector.load %arg8[%c0_15, %c0_16] : memref<16x64xf32, #tpu.memory_space<vmem>>, vector<2x32xf32>
    tpu.vector_store %arg8[%c0_15, %c0_16], %43 {strides = array<i32>} : memref<16x64xf32, #tpu.memory_space<vmem>>, vector<2x32xf32>,
    %45 = vector.extract_strided_slice %42 {offsets = [0, 32], sizes = [2, 32], strides = [1, 1]} : vector<2x64xf32> to vector<2x32xf32>
    %c14 = arith.constant 14 : index
    %c32 = arith.constant 32 : index
    %46 = vector.load %arg8[%c14, %c32] : memref<16x64xf32, #tpu.memory_space<vmem>>, vector<2x32xf32>
    tpu.vector_store %arg8[%c14, %c32], %45 {strides = array<i32>} : memref<16x64xf32, #tpu.memory_space<vmem>>, vector<2x32xf32>,
    %47 = vector.extract_strided_slice %9 {offsets = [2, 0], sizes = [2, 256], strides = [1, 1]} : vector<16x256xf32> to vector<2x256xf32>
    %48 = vector.extract_strided_slice %9 {offsets = [12, 0], sizes = [2, 256], strides = [1, 1]} : vector<16x256xf32> to vector<2x256xf32>
    %49 = arith.select %3, %47, %48 : vector<2x256xi1>, vector<2x256xf32>
    %50 = arith.truncf %42 : vector<2x64xf32> to vector<2x64xbf16>
    %cst_17 = arith.constant dense<0.000000e+00> : vector<2x256xf32>
    %51 = tpu.matmul %50, %0, %cst_17 {dimension_numbers = #tpu.dot_dimension_numbers<[1], [0], [0], [1], [0, 0, 1, 1], [], []>} : vector<2x64xbf16>, vector<64x256xbf16>, vector<2x256xf32> -> vector<2x256xf32>
    %52 = arith.addf %49, %51 : vector<2x256xf32>
    %53 = vector.extract_strided_slice %52 {offsets = [0, 0], sizes = [2, 64], strides = [1, 1]} : vector<2x256xf32> to vector<2x64xf32>
    %54 = arith.negf %53 : vector<2x64xf32>
    %55 = math.exp %54 : vector<2x64xf32>
    %cst_18 = arith.constant 1.000000e+00 : f32
    %56 = vector.broadcast %cst_18 : f32 to vector<2x64xf32>
    %57 = arith.addf %56, %55 : vector<2x64xf32>
    %58 = arith.divf %56, %57 : vector<2x64xf32>
    %59 = vector.extract_strided_slice %52 {offsets = [0, 64], sizes = [2, 64], strides = [1, 1]} : vector<2x256xf32> to vector<2x64xf32>
    %60 = arith.negf %59 : vector<2x64xf32>
    %61 = math.exp %60 : vector<2x64xf32>
    %cst_19 = arith.constant 1.000000e+00 : f32
    %62 = vector.broadcast %cst_19 : f32 to vector<2x64xf32>
    %63 = arith.addf %62, %61 : vector<2x64xf32>
    %64 = arith.divf %62, %63 : vector<2x64xf32>
    %65 = vector.extract_strided_slice %52 {offsets = [0, 128], sizes = [2, 64], strides = [1, 1]} : vector<2x256xf32> to vector<2x64xf32>
    %66 = math.tanh %65 : vector<2x64xf32>
    %67 = vector.extract_strided_slice %52 {offsets = [0, 192], sizes = [2, 64], strides = [1, 1]} : vector<2x256xf32> to vector<2x64xf32>
    %68 = arith.negf %67 : vector<2x64xf32>
    %69 = math.exp %68 : vector<2x64xf32>
    %cst_20 = arith.constant 1.000000e+00 : f32
    %70 = vector.broadcast %cst_20 : f32 to vector<2x64xf32>
    %71 = arith.addf %70, %69 : vector<2x64xf32>
    %72 = arith.divf %70, %71 : vector<2x64xf32>
    %73 = arith.mulf %64, %40 : vector<2x64xf32>
    %74 = arith.mulf %58, %66 : vector<2x64xf32>
    %75 = arith.addf %73, %74 : vector<2x64xf32>
    %76 = math.tanh %75 : vector<2x64xf32>
    %77 = arith.mulf %72, %76 : vector<2x64xf32>
    %78 = vector.extract_strided_slice %77 {offsets = [0, 0], sizes = [2, 32], strides = [1, 1]} : vector<2x64xf32> to vector<2x32xf32>
    %c2 = arith.constant 2 : index
    %c0_21 = arith.constant 0 : index
    %79 = vector.load %arg8[%c2, %c0_21] : memref<16x64xf32, #tpu.memory_space<vmem>>, vector<2x32xf32>
    tpu.vector_store %arg8[%c2, %c0_21], %78 {strides = array<i32>} : memref<16x64xf32, #tpu.memory_space<vmem>>, vector<2x32xf32>,
    %80 = vector.extract_strided_slice %77 {offsets = [0, 32], sizes = [2, 32], strides = [1, 1]} : vector<2x64xf32> to vector<2x32xf32>
    %c12 = arith.constant 12 : index
    %c32_22 = arith.constant 32 : index
    %81 = vector.load %arg8[%c12, %c32_22] : memref<16x64xf32, #tpu.memory_space<vmem>>, vector<2x32xf32>
    tpu.vector_store %arg8[%c12, %c32_22], %80 {strides = array<i32>} : memref<16x64xf32, #tpu.memory_space<vmem>>, vector<2x32xf32>,
    %82 = vector.extract_strided_slice %9 {offsets = [4, 0], sizes = [2, 256], strides = [1, 1]} : vector<16x256xf32> to vector<2x256xf32>
    %83 = vector.extract_strided_slice %9 {offsets = [10, 0], sizes = [2, 256], strides = [1, 1]} : vector<16x256xf32> to vector<2x256xf32>
    %84 = arith.select %3, %82, %83 : vector<2x256xi1>, vector<2x256xf32>
    %85 = arith.truncf %77 : vector<2x64xf32> to vector<2x64xbf16>
    %cst_23 = arith.constant dense<0.000000e+00> : vector<2x256xf32>
    %86 = tpu.matmul %85, %0, %cst_23 {dimension_numbers = #tpu.dot_dimension_numbers<[1], [0], [0], [1], [0, 0, 1, 1], [], []>} : vector<2x64xbf16>, vector<64x256xbf16>, vector<2x256xf32> -> vector<2x256xf32>
    %87 = arith.addf %84, %86 : vector<2x256xf32>
    %88 = vector.extract_strided_slice %87 {offsets = [0, 0], sizes = [2, 64], strides = [1, 1]} : vector<2x256xf32> to vector<2x64xf32>
    %89 = arith.negf %88 : vector<2x64xf32>
    %90 = math.exp %89 : vector<2x64xf32>
    %cst_24 = arith.constant 1.000000e+00 : f32
    %91 = vector.broadcast %cst_24 : f32 to vector<2x64xf32>
    %92 = arith.addf %91, %90 : vector<2x64xf32>
    %93 = arith.divf %91, %92 : vector<2x64xf32>
    %94 = vector.extract_strided_slice %87 {offsets = [0, 64], sizes = [2, 64], strides = [1, 1]} : vector<2x256xf32> to vector<2x64xf32>
    %95 = arith.negf %94 : vector<2x64xf32>
    %96 = math.exp %95 : vector<2x64xf32>
    %cst_25 = arith.constant 1.000000e+00 : f32
    %97 = vector.broadcast %cst_25 : f32 to vector<2x64xf32>
    %98 = arith.addf %97, %96 : vector<2x64xf32>
    %99 = arith.divf %97, %98 : vector<2x64xf32>
    %100 = vector.extract_strided_slice %87 {offsets = [0, 128], sizes = [2, 64], strides = [1, 1]} : vector<2x256xf32> to vector<2x64xf32>
    %101 = math.tanh %100 : vector<2x64xf32>
    %102 = vector.extract_strided_slice %87 {offsets = [0, 192], sizes = [2, 64], strides = [1, 1]} : vector<2x256xf32> to vector<2x64xf32>
    %103 = arith.negf %102 : vector<2x64xf32>
    %104 = math.exp %103 : vector<2x64xf32>
    %cst_26 = arith.constant 1.000000e+00 : f32
    %105 = vector.broadcast %cst_26 : f32 to vector<2x64xf32>
    %106 = arith.addf %105, %104 : vector<2x64xf32>
    %107 = arith.divf %105, %106 : vector<2x64xf32>
    %108 = arith.mulf %99, %75 : vector<2x64xf32>
    %109 = arith.mulf %93, %101 : vector<2x64xf32>
    %110 = arith.addf %108, %109 : vector<2x64xf32>
    %111 = math.tanh %110 : vector<2x64xf32>
    %112 = arith.mulf %107, %111 : vector<2x64xf32>
    %113 = vector.extract_strided_slice %112 {offsets = [0, 0], sizes = [2, 32], strides = [1, 1]} : vector<2x64xf32> to vector<2x32xf32>
    %c4 = arith.constant 4 : index
    %c0_27 = arith.constant 0 : index
    %114 = vector.load %arg8[%c4, %c0_27] : memref<16x64xf32, #tpu.memory_space<vmem>>, vector<2x32xf32>
    tpu.vector_store %arg8[%c4, %c0_27], %113 {strides = array<i32>} : memref<16x64xf32, #tpu.memory_space<vmem>>, vector<2x32xf32>,
    %115 = vector.extract_strided_slice %112 {offsets = [0, 32], sizes = [2, 32], strides = [1, 1]} : vector<2x64xf32> to vector<2x32xf32>
    %c10 = arith.constant 10 : index
    %c32_28 = arith.constant 32 : index
    %116 = vector.load %arg8[%c10, %c32_28] : memref<16x64xf32, #tpu.memory_space<vmem>>, vector<2x32xf32>
    tpu.vector_store %arg8[%c10, %c32_28], %115 {strides = array<i32>} : memref<16x64xf32, #tpu.memory_space<vmem>>, vector<2x32xf32>,
    %117 = vector.extract_strided_slice %9 {offsets = [6, 0], sizes = [2, 256], strides = [1, 1]} : vector<16x256xf32> to vector<2x256xf32>
    %118 = vector.extract_strided_slice %9 {offsets = [8, 0], sizes = [2, 256], strides = [1, 1]} : vector<16x256xf32> to vector<2x256xf32>
    %119 = arith.select %3, %117, %118 : vector<2x256xi1>, vector<2x256xf32>
    %120 = arith.truncf %112 : vector<2x64xf32> to vector<2x64xbf16>
    %cst_29 = arith.constant dense<0.000000e+00> : vector<2x256xf32>
    %121 = tpu.matmul %120, %0, %cst_29 {dimension_numbers = #tpu.dot_dimension_numbers<[1], [0], [0], [1], [0, 0, 1, 1], [], []>} : vector<2x64xbf16>, vector<64x256xbf16>, vector<2x256xf32> -> vector<2x256xf32>
    %122 = arith.addf %119, %121 : vector<2x256xf32>
    %123 = vector.extract_strided_slice %122 {offsets = [0, 0], sizes = [2, 64], strides = [1, 1]} : vector<2x256xf32> to vector<2x64xf32>
    %124 = arith.negf %123 : vector<2x64xf32>
    %125 = math.exp %124 : vector<2x64xf32>
    %cst_30 = arith.constant 1.000000e+00 : f32
    %126 = vector.broadcast %cst_30 : f32 to vector<2x64xf32>
    %127 = arith.addf %126, %125 : vector<2x64xf32>
    %128 = arith.divf %126, %127 : vector<2x64xf32>
    %129 = vector.extract_strided_slice %122 {offsets = [0, 64], sizes = [2, 64], strides = [1, 1]} : vector<2x256xf32> to vector<2x64xf32>
    %130 = arith.negf %129 : vector<2x64xf32>
    %131 = math.exp %130 : vector<2x64xf32>
    %cst_31 = arith.constant 1.000000e+00 : f32
    %132 = vector.broadcast %cst_31 : f32 to vector<2x64xf32>
    %133 = arith.addf %132, %131 : vector<2x64xf32>
    %134 = arith.divf %132, %133 : vector<2x64xf32>
    %135 = vector.extract_strided_slice %122 {offsets = [0, 128], sizes = [2, 64], strides = [1, 1]} : vector<2x256xf32> to vector<2x64xf32>
    %136 = math.tanh %135 : vector<2x64xf32>
    %137 = vector.extract_strided_slice %122 {offsets = [0, 192], sizes = [2, 64], strides = [1, 1]} : vector<2x256xf32> to vector<2x64xf32>
    %138 = arith.negf %137 : vector<2x64xf32>
    %139 = math.exp %138 : vector<2x64xf32>
    %cst_32 = arith.constant 1.000000e+00 : f32
    %140 = vector.broadcast %cst_32 : f32 to vector<2x64xf32>
    %141 = arith.addf %140, %139 : vector<2x64xf32>
    %142 = arith.divf %140, %141 : vector<2x64xf32>
    %143 = arith.mulf %134, %110 : vector<2x64xf32>
    %144 = arith.mulf %128, %136 : vector<2x64xf32>
    %145 = arith.addf %143, %144 : vector<2x64xf32>
    %146 = math.tanh %145 : vector<2x64xf32>
    %147 = arith.mulf %142, %146 : vector<2x64xf32>
    %148 = vector.extract_strided_slice %147 {offsets = [0, 0], sizes = [2, 32], strides = [1, 1]} : vector<2x64xf32> to vector<2x32xf32>
    %c6 = arith.constant 6 : index
    %c0_33 = arith.constant 0 : index
    %149 = vector.load %arg8[%c6, %c0_33] : memref<16x64xf32, #tpu.memory_space<vmem>>, vector<2x32xf32>
    tpu.vector_store %arg8[%c6, %c0_33], %148 {strides = array<i32>} : memref<16x64xf32, #tpu.memory_space<vmem>>, vector<2x32xf32>,
    %150 = vector.extract_strided_slice %147 {offsets = [0, 32], sizes = [2, 32], strides = [1, 1]} : vector<2x64xf32> to vector<2x32xf32>
    %c8 = arith.constant 8 : index
    %c32_34 = arith.constant 32 : index
    %151 = vector.load %arg8[%c8, %c32_34] : memref<16x64xf32, #tpu.memory_space<vmem>>, vector<2x32xf32>
    tpu.vector_store %arg8[%c8, %c32_34], %150 {strides = array<i32>} : memref<16x64xf32, #tpu.memory_space<vmem>>, vector<2x32xf32>,
    %152 = vector.extract_strided_slice %9 {offsets = [8, 0], sizes = [2, 256], strides = [1, 1]} : vector<16x256xf32> to vector<2x256xf32>
    %153 = vector.extract_strided_slice %9 {offsets = [6, 0], sizes = [2, 256], strides = [1, 1]} : vector<16x256xf32> to vector<2x256xf32>
    %154 = arith.select %3, %152, %153 : vector<2x256xi1>, vector<2x256xf32>
    %155 = arith.truncf %147 : vector<2x64xf32> to vector<2x64xbf16>
    %cst_35 = arith.constant dense<0.000000e+00> : vector<2x256xf32>
    %156 = tpu.matmul %155, %0, %cst_35 {dimension_numbers = #tpu.dot_dimension_numbers<[1], [0], [0], [1], [0, 0, 1, 1], [], []>} : vector<2x64xbf16>, vector<64x256xbf16>, vector<2x256xf32> -> vector<2x256xf32>
    %157 = arith.addf %154, %156 : vector<2x256xf32>
    %158 = vector.extract_strided_slice %157 {offsets = [0, 0], sizes = [2, 64], strides = [1, 1]} : vector<2x256xf32> to vector<2x64xf32>
    %159 = arith.negf %158 : vector<2x64xf32>
    %160 = math.exp %159 : vector<2x64xf32>
    %cst_36 = arith.constant 1.000000e+00 : f32
    %161 = vector.broadcast %cst_36 : f32 to vector<2x64xf32>
    %162 = arith.addf %161, %160 : vector<2x64xf32>
    %163 = arith.divf %161, %162 : vector<2x64xf32>
    %164 = vector.extract_strided_slice %157 {offsets = [0, 64], sizes = [2, 64], strides = [1, 1]} : vector<2x256xf32> to vector<2x64xf32>
    %165 = arith.negf %164 : vector<2x64xf32>
    %166 = math.exp %165 : vector<2x64xf32>
    %cst_37 = arith.constant 1.000000e+00 : f32
    %167 = vector.broadcast %cst_37 : f32 to vector<2x64xf32>
    %168 = arith.addf %167, %166 : vector<2x64xf32>
    %169 = arith.divf %167, %168 : vector<2x64xf32>
    %170 = vector.extract_strided_slice %157 {offsets = [0, 128], sizes = [2, 64], strides = [1, 1]} : vector<2x256xf32> to vector<2x64xf32>
    %171 = math.tanh %170 : vector<2x64xf32>
    %172 = vector.extract_strided_slice %157 {offsets = [0, 192], sizes = [2, 64], strides = [1, 1]} : vector<2x256xf32> to vector<2x64xf32>
    %173 = arith.negf %172 : vector<2x64xf32>
    %174 = math.exp %173 : vector<2x64xf32>
    %cst_38 = arith.constant 1.000000e+00 : f32
    %175 = vector.broadcast %cst_38 : f32 to vector<2x64xf32>
    %176 = arith.addf %175, %174 : vector<2x64xf32>
    %177 = arith.divf %175, %176 : vector<2x64xf32>
    %178 = arith.mulf %169, %145 : vector<2x64xf32>
    %179 = arith.mulf %163, %171 : vector<2x64xf32>
    %180 = arith.addf %178, %179 : vector<2x64xf32>
    %181 = math.tanh %180 : vector<2x64xf32>
    %182 = arith.mulf %177, %181 : vector<2x64xf32>
    %183 = vector.extract_strided_slice %182 {offsets = [0, 0], sizes = [2, 32], strides = [1, 1]} : vector<2x64xf32> to vector<2x32xf32>
    %c8_39 = arith.constant 8 : index
    %c0_40 = arith.constant 0 : index
    %184 = vector.load %arg8[%c8_39, %c0_40] : memref<16x64xf32, #tpu.memory_space<vmem>>, vector<2x32xf32>
    tpu.vector_store %arg8[%c8_39, %c0_40], %183 {strides = array<i32>} : memref<16x64xf32, #tpu.memory_space<vmem>>, vector<2x32xf32>,
    %185 = vector.extract_strided_slice %182 {offsets = [0, 32], sizes = [2, 32], strides = [1, 1]} : vector<2x64xf32> to vector<2x32xf32>
    %c6_41 = arith.constant 6 : index
    %c32_42 = arith.constant 32 : index
    %186 = vector.load %arg8[%c6_41, %c32_42] : memref<16x64xf32, #tpu.memory_space<vmem>>, vector<2x32xf32>
    tpu.vector_store %arg8[%c6_41, %c32_42], %185 {strides = array<i32>} : memref<16x64xf32, #tpu.memory_space<vmem>>, vector<2x32xf32>,
    %187 = vector.extract_strided_slice %9 {offsets = [10, 0], sizes = [2, 256], strides = [1, 1]} : vector<16x256xf32> to vector<2x256xf32>
    %188 = vector.extract_strided_slice %9 {offsets = [4, 0], sizes = [2, 256], strides = [1, 1]} : vector<16x256xf32> to vector<2x256xf32>
    %189 = arith.select %3, %187, %188 : vector<2x256xi1>, vector<2x256xf32>
    %190 = arith.truncf %182 : vector<2x64xf32> to vector<2x64xbf16>
    %cst_43 = arith.constant dense<0.000000e+00> : vector<2x256xf32>
    %191 = tpu.matmul %190, %0, %cst_43 {dimension_numbers = #tpu.dot_dimension_numbers<[1], [0], [0], [1], [0, 0, 1, 1], [], []>} : vector<2x64xbf16>, vector<64x256xbf16>, vector<2x256xf32> -> vector<2x256xf32>
    %192 = arith.addf %189, %191 : vector<2x256xf32>
    %193 = vector.extract_strided_slice %192 {offsets = [0, 0], sizes = [2, 64], strides = [1, 1]} : vector<2x256xf32> to vector<2x64xf32>
    %194 = arith.negf %193 : vector<2x64xf32>
    %195 = math.exp %194 : vector<2x64xf32>
    %cst_44 = arith.constant 1.000000e+00 : f32
    %196 = vector.broadcast %cst_44 : f32 to vector<2x64xf32>
    %197 = arith.addf %196, %195 : vector<2x64xf32>
    %198 = arith.divf %196, %197 : vector<2x64xf32>
    %199 = vector.extract_strided_slice %192 {offsets = [0, 64], sizes = [2, 64], strides = [1, 1]} : vector<2x256xf32> to vector<2x64xf32>
    %200 = arith.negf %199 : vector<2x64xf32>
    %201 = math.exp %200 : vector<2x64xf32>
    %cst_45 = arith.constant 1.000000e+00 : f32
    %202 = vector.broadcast %cst_45 : f32 to vector<2x64xf32>
    %203 = arith.addf %202, %201 : vector<2x64xf32>
    %204 = arith.divf %202, %203 : vector<2x64xf32>
    %205 = vector.extract_strided_slice %192 {offsets = [0, 128], sizes = [2, 64], strides = [1, 1]} : vector<2x256xf32> to vector<2x64xf32>
    %206 = math.tanh %205 : vector<2x64xf32>
    %207 = vector.extract_strided_slice %192 {offsets = [0, 192], sizes = [2, 64], strides = [1, 1]} : vector<2x256xf32> to vector<2x64xf32>
    %208 = arith.negf %207 : vector<2x64xf32>
    %209 = math.exp %208 : vector<2x64xf32>
    %cst_46 = arith.constant 1.000000e+00 : f32
    %210 = vector.broadcast %cst_46 : f32 to vector<2x64xf32>
    %211 = arith.addf %210, %209 : vector<2x64xf32>
    %212 = arith.divf %210, %211 : vector<2x64xf32>
    %213 = arith.mulf %204, %180 : vector<2x64xf32>
    %214 = arith.mulf %198, %206 : vector<2x64xf32>
    %215 = arith.addf %213, %214 : vector<2x64xf32>
    %216 = math.tanh %215 : vector<2x64xf32>
    %217 = arith.mulf %212, %216 : vector<2x64xf32>
    %218 = vector.extract_strided_slice %217 {offsets = [0, 0], sizes = [2, 32], strides = [1, 1]} : vector<2x64xf32> to vector<2x32xf32>
    %c10_47 = arith.constant 10 : index
    %c0_48 = arith.constant 0 : index
    %219 = vector.load %arg8[%c10_47, %c0_48] : memref<16x64xf32, #tpu.memory_space<vmem>>, vector<2x32xf32>
    tpu.vector_store %arg8[%c10_47, %c0_48], %218 {strides = array<i32>} : memref<16x64xf32, #tpu.memory_space<vmem>>, vector<2x32xf32>,
    %220 = vector.extract_strided_slice %217 {offsets = [0, 32], sizes = [2, 32], strides = [1, 1]} : vector<2x64xf32> to vector<2x32xf32>
    %c4_49 = arith.constant 4 : index
    %c32_50 = arith.constant 32 : index
    %221 = vector.load %arg8[%c4_49, %c32_50] : memref<16x64xf32, #tpu.memory_space<vmem>>, vector<2x32xf32>
    tpu.vector_store %arg8[%c4_49, %c32_50], %220 {strides = array<i32>} : memref<16x64xf32, #tpu.memory_space<vmem>>, vector<2x32xf32>,
    %222 = vector.extract_strided_slice %9 {offsets = [12, 0], sizes = [2, 256], strides = [1, 1]} : vector<16x256xf32> to vector<2x256xf32>
    %223 = vector.extract_strided_slice %9 {offsets = [2, 0], sizes = [2, 256], strides = [1, 1]} : vector<16x256xf32> to vector<2x256xf32>
    %224 = arith.select %3, %222, %223 : vector<2x256xi1>, vector<2x256xf32>
    %225 = arith.truncf %217 : vector<2x64xf32> to vector<2x64xbf16>
    %cst_51 = arith.constant dense<0.000000e+00> : vector<2x256xf32>
    %226 = tpu.matmul %225, %0, %cst_51 {dimension_numbers = #tpu.dot_dimension_numbers<[1], [0], [0], [1], [0, 0, 1, 1], [], []>} : vector<2x64xbf16>, vector<64x256xbf16>, vector<2x256xf32> -> vector<2x256xf32>
    %227 = arith.addf %224, %226 : vector<2x256xf32>
    %228 = vector.extract_strided_slice %227 {offsets = [0, 0], sizes = [2, 64], strides = [1, 1]} : vector<2x256xf32> to vector<2x64xf32>
    %229 = arith.negf %228 : vector<2x64xf32>
    %230 = math.exp %229 : vector<2x64xf32>
    %cst_52 = arith.constant 1.000000e+00 : f32
    %231 = vector.broadcast %cst_52 : f32 to vector<2x64xf32>
    %232 = arith.addf %231, %230 : vector<2x64xf32>
    %233 = arith.divf %231, %232 : vector<2x64xf32>
    %234 = vector.extract_strided_slice %227 {offsets = [0, 64], sizes = [2, 64], strides = [1, 1]} : vector<2x256xf32> to vector<2x64xf32>
    %235 = arith.negf %234 : vector<2x64xf32>
    %236 = math.exp %235 : vector<2x64xf32>
    %cst_53 = arith.constant 1.000000e+00 : f32
    %237 = vector.broadcast %cst_53 : f32 to vector<2x64xf32>
    %238 = arith.addf %237, %236 : vector<2x64xf32>
    %239 = arith.divf %237, %238 : vector<2x64xf32>
    %240 = vector.extract_strided_slice %227 {offsets = [0, 128], sizes = [2, 64], strides = [1, 1]} : vector<2x256xf32> to vector<2x64xf32>
    %241 = math.tanh %240 : vector<2x64xf32>
    %242 = vector.extract_strided_slice %227 {offsets = [0, 192], sizes = [2, 64], strides = [1, 1]} : vector<2x256xf32> to vector<2x64xf32>
    %243 = arith.negf %242 : vector<2x64xf32>
    %244 = math.exp %243 : vector<2x64xf32>
    %cst_54 = arith.constant 1.000000e+00 : f32
    %245 = vector.broadcast %cst_54 : f32 to vector<2x64xf32>
    %246 = arith.addf %245, %244 : vector<2x64xf32>
    %247 = arith.divf %245, %246 : vector<2x64xf32>
    %248 = arith.mulf %239, %215 : vector<2x64xf32>
    %249 = arith.mulf %233, %241 : vector<2x64xf32>
    %250 = arith.addf %248, %249 : vector<2x64xf32>
    %251 = math.tanh %250 : vector<2x64xf32>
    %252 = arith.mulf %247, %251 : vector<2x64xf32>
    %253 = vector.extract_strided_slice %252 {offsets = [0, 0], sizes = [2, 32], strides = [1, 1]} : vector<2x64xf32> to vector<2x32xf32>
    %c12_55 = arith.constant 12 : index
    %c0_56 = arith.constant 0 : index
    %254 = vector.load %arg8[%c12_55, %c0_56] : memref<16x64xf32, #tpu.memory_space<vmem>>, vector<2x32xf32>
    tpu.vector_store %arg8[%c12_55, %c0_56], %253 {strides = array<i32>} : memref<16x64xf32, #tpu.memory_space<vmem>>, vector<2x32xf32>,
    %255 = vector.extract_strided_slice %252 {offsets = [0, 32], sizes = [2, 32], strides = [1, 1]} : vector<2x64xf32> to vector<2x32xf32>
    %c2_57 = arith.constant 2 : index
    %c32_58 = arith.constant 32 : index
    %256 = vector.load %arg8[%c2_57, %c32_58] : memref<16x64xf32, #tpu.memory_space<vmem>>, vector<2x32xf32>
    tpu.vector_store %arg8[%c2_57, %c32_58], %255 {strides = array<i32>} : memref<16x64xf32, #tpu.memory_space<vmem>>, vector<2x32xf32>,
    %257 = vector.extract_strided_slice %9 {offsets = [14, 0], sizes = [2, 256], strides = [1, 1]} : vector<16x256xf32> to vector<2x256xf32>
    %258 = vector.extract_strided_slice %9 {offsets = [0, 0], sizes = [2, 256], strides = [1, 1]} : vector<16x256xf32> to vector<2x256xf32>
    %259 = arith.select %3, %257, %258 : vector<2x256xi1>, vector<2x256xf32>
    %260 = arith.truncf %252 : vector<2x64xf32> to vector<2x64xbf16>
    %cst_59 = arith.constant dense<0.000000e+00> : vector<2x256xf32>
    %261 = tpu.matmul %260, %0, %cst_59 {dimension_numbers = #tpu.dot_dimension_numbers<[1], [0], [0], [1], [0, 0, 1, 1], [], []>} : vector<2x64xbf16>, vector<64x256xbf16>, vector<2x256xf32> -> vector<2x256xf32>
    %262 = arith.addf %259, %261 : vector<2x256xf32>
    %263 = vector.extract_strided_slice %262 {offsets = [0, 0], sizes = [2, 64], strides = [1, 1]} : vector<2x256xf32> to vector<2x64xf32>
    %264 = arith.negf %263 : vector<2x64xf32>
    %265 = math.exp %264 : vector<2x64xf32>
    %cst_60 = arith.constant 1.000000e+00 : f32
    %266 = vector.broadcast %cst_60 : f32 to vector<2x64xf32>
    %267 = arith.addf %266, %265 : vector<2x64xf32>
    %268 = arith.divf %266, %267 : vector<2x64xf32>
    %269 = vector.extract_strided_slice %262 {offsets = [0, 64], sizes = [2, 64], strides = [1, 1]} : vector<2x256xf32> to vector<2x64xf32>
    %270 = arith.negf %269 : vector<2x64xf32>
    %271 = math.exp %270 : vector<2x64xf32>
    %cst_61 = arith.constant 1.000000e+00 : f32
    %272 = vector.broadcast %cst_61 : f32 to vector<2x64xf32>
    %273 = arith.addf %272, %271 : vector<2x64xf32>
    %274 = arith.divf %272, %273 : vector<2x64xf32>
    %275 = vector.extract_strided_slice %262 {offsets = [0, 128], sizes = [2, 64], strides = [1, 1]} : vector<2x256xf32> to vector<2x64xf32>
    %276 = math.tanh %275 : vector<2x64xf32>
    %277 = vector.extract_strided_slice %262 {offsets = [0, 192], sizes = [2, 64], strides = [1, 1]} : vector<2x256xf32> to vector<2x64xf32>
    %278 = arith.negf %277 : vector<2x64xf32>
    %279 = math.exp %278 : vector<2x64xf32>
    %cst_62 = arith.constant 1.000000e+00 : f32
    %280 = vector.broadcast %cst_62 : f32 to vector<2x64xf32>
    %281 = arith.addf %280, %279 : vector<2x64xf32>
    %282 = arith.divf %280, %281 : vector<2x64xf32>
    %283 = arith.mulf %274, %250 : vector<2x64xf32>
    %284 = arith.mulf %268, %276 : vector<2x64xf32>
    %285 = arith.addf %283, %284 : vector<2x64xf32>
    %286 = math.tanh %285 : vector<2x64xf32>
    %287 = arith.mulf %282, %286 : vector<2x64xf32>
    %288 = vector.extract_strided_slice %287 {offsets = [0, 0], sizes = [2, 32], strides = [1, 1]} : vector<2x64xf32> to vector<2x32xf32>
    %c14_63 = arith.constant 14 : index
    %c0_64 = arith.constant 0 : index
    %289 = vector.load %arg8[%c14_63, %c0_64] : memref<16x64xf32, #tpu.memory_space<vmem>>, vector<2x32xf32>
    tpu.vector_store %arg8[%c14_63, %c0_64], %288 {strides = array<i32>} : memref<16x64xf32, #tpu.memory_space<vmem>>, vector<2x32xf32>,
    %290 = vector.extract_strided_slice %287 {offsets = [0, 32], sizes = [2, 32], strides = [1, 1]} : vector<2x64xf32> to vector<2x32xf32>
    %c0_65 = arith.constant 0 : index
    %c32_66 = arith.constant 32 : index
    %291 = vector.load %arg8[%c0_65, %c32_66] : memref<16x64xf32, #tpu.memory_space<vmem>>, vector<2x32xf32>
    tpu.vector_store %arg8[%c0_65, %c32_66], %290 {strides = array<i32>} : memref<16x64xf32, #tpu.memory_space<vmem>>, vector<2x32xf32>,
    %c0_67 = arith.constant 0 : index
    %c0_68 = arith.constant 0 : index
    %292 = vector.load %arg8[%c0_67, %c0_68] : memref<16x64xf32, #tpu.memory_space<vmem>>, vector<16x64xf32>
    %293 = arith.truncf %292 : vector<16x64xf32> to vector<16x64xbf16>
    %c0_69 = arith.constant 0 : index
    %c0_70 = arith.constant 0 : index
    %294 = vector.load %arg5[%c0_69, %c0_70] : memref<64x32xbf16, #tpu.memory_space<vmem>>, vector<64x32xbf16>
    %cst_71 = arith.constant dense<0.000000e+00> : vector<16x32xf32>
    %295 = tpu.matmul %293, %294, %cst_71 {dimension_numbers = #tpu.dot_dimension_numbers<[1], [0], [0], [1], [0, 0, 1, 1], [], []>} : vector<16x64xbf16>, vector<64x32xbf16>, vector<16x32xf32> -> vector<16x32xf32>
    %c0_72 = arith.constant 0 : index
    %c0_73 = arith.constant 0 : index
    %296 = vector.load %arg6[%c0_72, %c0_73] : memref<1x32xf32, #tpu.memory_space<vmem>>, vector<1x32xf32>
    %297 = vector.broadcast %296 : vector<1x32xf32> to vector<16x32xf32>
    %298 = arith.addf %295, %297 : vector<16x32xf32>
    %299 = vector.extract_strided_slice %298 {offsets = [0, 0], sizes = [2, 32], strides = [1, 1]} : vector<16x32xf32> to vector<2x32xf32>
    %300 = vector.extract_strided_slice %298 {offsets = [2, 0], sizes = [2, 32], strides = [1, 1]} : vector<16x32xf32> to vector<2x32xf32>
    %301 = arith.maximumf %299, %300 : vector<2x32xf32>
    %302 = vector.extract_strided_slice %298 {offsets = [4, 0], sizes = [2, 32], strides = [1, 1]} : vector<16x32xf32> to vector<2x32xf32>
    %303 = arith.maximumf %301, %302 : vector<2x32xf32>
    %304 = vector.extract_strided_slice %298 {offsets = [6, 0], sizes = [2, 32], strides = [1, 1]} : vector<16x32xf32> to vector<2x32xf32>
    %305 = arith.maximumf %303, %304 : vector<2x32xf32>
    %306 = vector.extract_strided_slice %298 {offsets = [8, 0], sizes = [2, 32], strides = [1, 1]} : vector<16x32xf32> to vector<2x32xf32>
    %307 = arith.maximumf %305, %306 : vector<2x32xf32>
    %308 = vector.extract_strided_slice %298 {offsets = [10, 0], sizes = [2, 32], strides = [1, 1]} : vector<16x32xf32> to vector<2x32xf32>
    %309 = arith.maximumf %307, %308 : vector<2x32xf32>
    %310 = vector.extract_strided_slice %298 {offsets = [12, 0], sizes = [2, 32], strides = [1, 1]} : vector<16x32xf32> to vector<2x32xf32>
    %311 = arith.maximumf %309, %310 : vector<2x32xf32>
    %312 = vector.extract_strided_slice %298 {offsets = [14, 0], sizes = [2, 32], strides = [1, 1]} : vector<16x32xf32> to vector<2x32xf32>
    %313 = arith.maximumf %311, %312 : vector<2x32xf32>
    %c0_74 = arith.constant 0 : index
    %c0_75 = arith.constant 0 : index
    %314 = vector.load %arg7[%c0_74, %c0_75] : memref<2x32xf32, #tpu.memory_space<vmem>>, vector<2x32xf32>
    tpu.vector_store %arg7[%c0_74, %c0_75], %313 {strides = array<i32>} : memref<2x32xf32, #tpu.memory_space<vmem>>, vector<2x32xf32>,
    return
  }
}

</mosaic_0001>

<llo_original>
// kernel: lstm_net_forward.1
$region0: #{lstm_net_forward.1}
  #allocation0 [shape = 'u32[]', space=smem, size = 0x4, offset = 0x4, fixed_abs, tag = 'smem constant byte address 0x4 - core index']
  #allocation1 [shape = 'u32[144,128]{1,0:T(1,128)}', space=vmem, size = 0x12000, scoped, tag = 'internal scratch']
  #allocation2 [shape = 'f32[16,64]{1,0:T(8,128)}', space=vmem, size = 0x2000, scoped, tag = 'scratch operand']
  %s0 = inlined_call_operand.vmem [shape: bf16[16,4], index: 0, kind: input, shape index: {}]
  %s1 = inlined_call_operand.vmem [shape: bf16[4,256], index: 1, kind: input, shape index: {}]
  %s2 = inlined_call_operand.vmem [shape: f32[1,256], index: 2, kind: input, shape index: {}]
  %s3 = inlined_call_operand.vmem [shape: bf16[64,256], index: 3, kind: input, shape index: {}]
  %s4 = inlined_call_operand.vmem [shape: s32[2,256], index: 4, kind: input, shape index: {}]
  %s5 = inlined_call_operand.vmem [shape: bf16[64,32], index: 5, kind: input, shape index: {}]
  %s6 = inlined_call_operand.vmem [shape: f32[1,32], index: 6, kind: input, shape index: {}]
  %s7 = inlined_call_operand.hbm [shape: f32[2,32], index: 7, kind: output, shape index: {}]
  %s8 = sld [smem:[#allocation0]]
  $region38: #{lstm_net_forward.1} parent=0
    _
  %s10 = ssub.s32 1, %s8
  %s11 = scalar_select 0, %s10, %s8
  $region1: #{lstm_net_forward.1} parent=0
    #allocation3 [shape = 'u8[1024]{0}', space=vmem, size = 0x400, scoped, tag = 'output window, operand 0, single buffered']
    #allocation4 [shape = 's32[1]{0}', space=sflag, size = 0x4, scoped, tag = 'scoped memory for lstm_net_forward.1']
    %12 = vsyncpa [#allocation4], 0
    // Predicated region
    $region2: #{lstm_net_forward.1} parent=1 // pred_check
      _
    $region3: #{lstm_net_forward.1} parent=1 // pred_check_branch
      %14 = sbr.rel (0) target = $region5
    $region4: #{lstm_net_forward.1} parent=1 // pred_region
      _
    $region5: #{lstm_net_forward.1} parent=1 // pred_fallthru
      _
    // Predicated region
    $region6: #{lstm_net_forward.1} parent=1 // pred_check
      _
    $region7: #{lstm_net_forward.1} parent=1 // pred_check_branch
      %16 = sbr.rel (0) target = $region9
    $region8: #{lstm_net_forward.1} parent=1 // pred_region
      _
    $region9: #{lstm_net_forward.1} parent=1 // pred_fallthru
      _
    // Predicated region
    $region10: #{lstm_net_forward.1} parent=1 // pred_check
      _
    $region11: #{lstm_net_forward.1} parent=1 // pred_check_branch
      %18 = sbr.rel (0) target = $region13
    $region12: #{lstm_net_forward.1} parent=1 // pred_region
      _
    $region13: #{lstm_net_forward.1} parent=1 // pred_fallthru
      _
    // Predicated region
    $region14: #{lstm_net_forward.1} parent=1 // pred_check
      _
    $region15: #{lstm_net_forward.1} parent=1 // pred_check_branch
      %20 = sbr.rel (0) target = $region17
    $region16: #{lstm_net_forward.1} parent=1 // pred_region
      _
    $region17: #{lstm_net_forward.1} parent=1 // pred_fallthru
      _
    // Predicated region
    $region18: #{lstm_net_forward.1} parent=1 // pred_check
      _
    $region19: #{lstm_net_forward.1} parent=1 // pred_check_branch
      %22 = sbr.rel (0) target = $region21
    $region20: #{lstm_net_forward.1} parent=1 // pred_region
      _
    $region21: #{lstm_net_forward.1} parent=1 // pred_fallthru
      _
    // Predicated region
    $region22: #{lstm_net_forward.1} parent=1 // pred_check
      _
    $region23: #{lstm_net_forward.1} parent=1 // pred_check_branch
      %24 = sbr.rel (0) target = $region25
    $region24: #{lstm_net_forward.1} parent=1 // pred_region
      _
    $region25: #{lstm_net_forward.1} parent=1 // pred_fallthru
      _
    // Predicated region
    $region26: #{lstm_net_forward.1} parent=1 // pred_check
      _
    $region27: #{lstm_net_forward.1} parent=1 // pred_check_branch
      %26 = sbr.rel (0) target = $region29
    $region28: #{lstm_net_forward.1} parent=1 // pred_region
      _
    $region29: #{lstm_net_forward.1} parent=1 // pred_fallthru
      _
    %v28 = vld [vmem:[%s3] sm:$0xff]
    %v29 = vld [vmem:[%s3 + $0x8] sm:$0xff]
    %v30 = vld [vmem:[%s3 + $0x10] sm:$0xff]
    %v31 = vld [vmem:[%s3 + $0x18] sm:$0xff]
    %v32 = vld [vmem:[%s3 + $0x20] sm:$0xff]
    %v33 = vld [vmem:[%s3 + $0x28] sm:$0xff]
    %v34 = vld [vmem:[%s3 + $0x30] sm:$0xff]
    %v35 = vld [vmem:[%s3 + $0x38] sm:$0xff]
    %v36 = vld [vmem:[%s4] sm:$0xf]
    %vm37 = vcmp.ne.s32.totalorder %v36, 0
    %v38 = vld [vmem:[%s0] sm:$0xf]
    %v39 = vld [vmem:[%s0 + $0x4] sm:$0xf]
    %v40 = vld [vmem:[%s1] sm:$0xf]
    %v41 = vld [vmem:[%s2] sm:$0x3]
    %v43 = vlaneseq
    %v44 = vshrl.u32 %v43, 7
    %v45 = vsub.s32 0, %v44
    %v46 = vrot.slane %v41, %v45
    %v47 = vlaneseq
    %v48 = vshrl.u32 %v47, 7
    %v49 = vsub.s32 1, %v48
    %v50 = vrot.slane %v41, %v49
    %v55 = vunpack.c.l.b16 %v38
    %v56 = vunpack.c.l.b16 %v39
    %v57 = vpack.c.b16 %v56, %v55
    %v60 = vunpack.c.l.s4 1983009808
    %v61 = vunpack.c.0.s8 %v60
    %v62 = vlaneseq
    %v63 = vshrl.u32 %v62, 7
    %v64 = vsub.s32 %v61, %v63
    %v65 = vrot.slane %v40, %v64
    %v66 = vcombine.high %v65, %v65
    %vm67 = vcmask 31744
    %v69 = vsel %vm67, %v57, 0
    %vm71 = vcmask 1041408
    %v73 = vsel %vm71, %v65, 0
    %v76 = vsel %vm71, %v66, 0
    %78 = vmatprep.subr.bf16.mxu0 0
    %79 = vmatpush1.bf16.msra.mxu0 0
    %80 = vmatprep.subr.bf16.mxu0 0
    %81 = vmatpush1.bf16.msra.mxu0 0
    %82 = vmatprep.subr.bf16.mxu0 0
    %83 = vmatpush1.bf16.msra.mxu0 0
    %84 = vmatprep.subr.bf16.mxu0 0
    %85 = vmatpush1.bf16.msra.mxu0 0
    %86 = vmatprep.subr.bf16.mxu0 0
    %87 = vmatpush1.bf16.msra.mxu0 0
    %88 = vmatprep.subr.bf16.mxu0 0
    %89 = vmatpush1.bf16.msra.mxu0 0
    %90 = vmatprep.subr.bf16.mxu0 0
    %91 = vmatpush1.bf16.msra.mxu0 0
    %92 = vmatprep.subr.bf16.mxu0 %v76
    %93 = vmatpush1.bf16.msra.mxu0 %v73
    %94 = vmatprep.subr.bf16.mxu0 0
    %95 = vmatpush2.bf16.msra.mxu0 0
    %96 = vmatprep.subr.bf16.mxu0 0
    %97 = vmatpush2.bf16.msra.mxu0 0
    %98 = vmatprep.subr.bf16.mxu0 0
    %99 = vmatpush2.bf16.msra.mxu0 0
    %100 = vmatprep.subr.bf16.mxu0 0
    %101 = vmatpush2.bf16.msra.mxu0 0
    %102 = vmatprep.subr.bf16.mxu0 0
    %103 = vmatpush2.bf16.msra.mxu0 0
    %104 = vmatprep.subr.bf16.mxu0 0
    %105 = vmatpush2.bf16.msra.mxu0 0
    %106 = vmatprep.subr.bf16.mxu0 0
    %107 = vmatpush2.bf16.msra.mxu0 0
    %108 = vmatprep.subr.bf16.mxu0 0
    %109 = vmatpush2.bf16.msra.mxu0 0
    %110 = vmatprep.mubr.bf16.mxu0 0
    %111 = vmatmul.mubr.bf16.gmra.mxu0 %v69
    %v112 = vpop.f32.mrf.mxu0
    %v113 = vadd.f32 %v46, %v112
    %v114 = vpop.f32.mrf.mxu0
    %v115 = vadd.f32 %v50, %v114
    %v116 = vpop.f32.mrf.mxu0
    %v117 = vadd.f32 %v46, %v116
    %v118 = vpop.f32.mrf.mxu0
    %v119 = vadd.f32 %v50, %v118
    %120 = vdwg.mxu0
    %v123 = vcombine.low %v113, %v115
    %v125 = vunpack.c.l.s4 1983009808
    %v126 = vunpack.c.0.s8 %v125
    %v127 = vlaneseq
    %v128 = vshrl.u32 %v127, 7
    %v129 = vsub.s32 %v126, %v128
    %v130 = vrot.slane %v123, %v129
    %v134 = vcombine.high %v117, %v119
    %v136 = vunpack.c.l.s4 1983009808
    %v137 = vunpack.c.0.s8 %v136
    %v138 = vlaneseq
    %v139 = vshrl.u32 %v138, 7
    %v140 = vsub.s32 %v137, %v139
    %v141 = vrot.slane %v134, %v140
    %v142 = vcombine.high %v141, %v141
    %v144 = vsel %vm37, %v130, %v142
    %v153 = vunpack.c.l.b16 %v28
    %v154 = vunpack.c.h.b16 %v28
    %v155 = vunpack.c.l.b16 %v29
    %v156 = vunpack.c.h.b16 %v29
    %v157 = vunpack.c.l.b16 %v30
    %v158 = vunpack.c.h.b16 %v30
    %v159 = vunpack.c.l.b16 %v31
    %v160 = vunpack.c.h.b16 %v31
    %v161 = vunpack.c.l.b16 %v32
    %v162 = vunpack.c.h.b16 %v32
    %v163 = vunpack.c.l.b16 %v33
    %v164 = vunpack.c.h.b16 %v33
    %v165 = vunpack.c.l.b16 %v34
    %v166 = vunpack.c.h.b16 %v34
    %v167 = vunpack.c.l.b16 %v35
    %v168 = vunpack.c.h.b16 %v35
    %v169 = vpack.c.b16 %v155, %v153
    %v170 = vpack.c.b16 %v156, %v154
    %v171 = vpack.c.b16 %v159, %v157
    %v172 = vpack.c.b16 %v160, %v158
    %v173 = vpack.c.b16 %v163, %v161
    %v174 = vpack.c.b16 %v164, %v162
    %v175 = vpack.c.b16 %v167, %v165
    %v176 = vpack.c.b16 %v168, %v166
    %vm185 = vcmask 523264
    %v187 = vsel %vm185, 0, 0
    %189 = vmatprep.subr.bf16.mxu0 0
    %190 = vmatpush1.bf16.msra.mxu0 0
    %191 = vmatprep.subr.bf16.mxu0 0
    %192 = vmatpush1.bf16.msra.mxu0 0
    %193 = vmatprep.subr.bf16.mxu0 0
    %194 = vmatpush1.bf16.msra.mxu0 0
    %195 = vmatprep.subr.bf16.mxu0 0
    %196 = vmatpush1.bf16.msra.mxu0 0
    %197 = vmatprep.subr.bf16.mxu0 %v176
    %198 = vmatpush1.bf16.msra.mxu0 %v175
    %199 = vmatprep.subr.bf16.mxu0 %v174
    %200 = vmatpush1.bf16.msra.mxu0 %v173
    %201 = vmatprep.subr.bf16.mxu0 %v172
    %202 = vmatpush1.bf16.msra.mxu0 %v171
    %203 = vmatprep.subr.bf16.mxu0 %v170
    %204 = vmatpush1.bf16.msra.mxu0 %v169
    %205 = vmatprep.subr.bf16.mxu0 0
    %206 = vmatpush2.bf16.msra.mxu0 0
    %207 = vmatprep.subr.bf16.mxu0 0
    %208 = vmatpush2.bf16.msra.mxu0 0
    %209 = vmatprep.subr.bf16.mxu0 0
    %210 = vmatpush2.bf16.msra.mxu0 0
    %211 = vmatprep.subr.bf16.mxu0 0
    %212 = vmatpush2.bf16.msra.mxu0 0
    %213 = vmatprep.subr.bf16.mxu0 0
    %214 = vmatpush2.bf16.msra.mxu0 0
    %215 = vmatprep.subr.bf16.mxu0 0
    %216 = vmatpush2.bf16.msra.mxu0 0
    %217 = vmatprep.subr.bf16.mxu0 0
    %218 = vmatpush2.bf16.msra.mxu0 0
    %219 = vmatprep.subr.bf16.mxu0 0
    %220 = vmatpush2.bf16.msra.mxu0 0
    %221 = vmatprep.mubr.bf16.mxu0 0
    %222 = vmatmul.mubr.bf16.gmra.mxu0 %v187
    %v223 = vpop.f32.mrf.mxu0
    %v224 = vadd.f32 0.0, %v223
    %v225 = vpop.f32.mrf.mxu0
    %v226 = vadd.f32 0.0, %v225
    %v227 = vpop.f32.mrf.mxu0
    %v228 = vpop.f32.mrf.mxu0
    %229 = vdwg.mxu0
    %v232 = vcombine.low %v224, %v226
    %v234 = vunpack.c.l.s4 1983009808
    %v235 = vunpack.c.0.s8 %v234
    %v236 = vlaneseq
    %v237 = vshrl.u32 %v236, 7
    %v238 = vsub.s32 %v235, %v237
    %v239 = vrot.slane %v232, %v238
    %v241 = vadd.f32 %v144, %v239
    %v242 = vxor.u32 %v241, 2147483648
    %v243 = vmul.f32 %v242, 1.442695
    %v244 = vpow.pop %v243
    %v245 = vadd.f32 %v244, 1.0
    %v246 = vrcp.pop %v245
    %v247 = vmul.f32 1.0, %v246
    %v249 = vrot.slane %v241, 2
    %v251 = vtanh.pop %v249
    %252 = vrot.lane.b32.xlu0 %v241, 64
    %v253 = vpop.permute.xlu0 %252
    %v254 = vrot.slane %v253, 2
    %v256 = vxor.u32 %v254, 2147483648
    %v257 = vmul.f32 %v256, 1.442695
    %v258 = vpow.pop %v257
    %v259 = vadd.f32 %v258, 1.0
    %v260 = vrcp.pop %v259
    %v261 = vmul.f32 1.0, %v260
    %v262 = vmul.f32 %v247, 0.0
    %v263 = vmul.f32 %v247, %v251
    %265 = vrot.lane.b32.xlu0 %v263, 64
    %v266 = vpop.permute.xlu0 %265
    %v268 = vadd.f32 %v262, %v266
    %v269 = vtanh.pop %v268
    %271 = vrot.lane.b32.xlu0 %v269, 64
    %v272 = vpop.permute.xlu0 %271
    %v274 = vmul.f32 %v261, %v272
    %vm275 = vcmask 254976
    %276 = vst.msk [vmem:[#allocation2] sm:$0x3] %vm275, %v274
    %vm277 = vcmask 517376
    %278 = vst.msk [vmem:[#allocation2 + $0xe] sm:$0x3] %vm277, %v274
    %v279 = vcombine.high %v130, %v130
    %v282 = vsel %vm37, %v279, %v141
    %v283 = vpack.c.bf16 %v274, %v274
    %v285 = vsel %vm185, %v283, 0
    %287 = vmatprep.subr.bf16.mxu0 0
    %288 = vmatpush1.bf16.msra.mxu0 0
    %289 = vmatprep.subr.bf16.mxu0 0
    %290 = vmatpush1.bf16.msra.mxu0 0
    %291 = vmatprep.subr.bf16.mxu0 0
    %292 = vmatpush1.bf16.msra.mxu0 0
    %293 = vmatprep.subr.bf16.mxu0 0
    %294 = vmatpush1.bf16.msra.mxu0 0
    %295 = vmatprep.subr.bf16.mxu0 %v176
    %296 = vmatpush1.bf16.msra.mxu0 %v175
    %297 = vmatprep.subr.bf16.mxu0 %v174
    %298 = vmatpush1.bf16.msra.mxu0 %v173
    %299 = vmatprep.subr.bf16.mxu0 %v172
    %300 = vmatpush1.bf16.msra.mxu0 %v171
    %301 = vmatprep.subr.bf16.mxu0 %v170
    %302 = vmatpush1.bf16.msra.mxu0 %v169
    %303 = vmatprep.subr.bf16.mxu0 0
    %304 = vmatpush2.bf16.msra.mxu0 0
    %305 = vmatprep.subr.bf16.mxu0 0
    %306 = vmatpush2.bf16.msra.mxu0 0
    %307 = vmatprep.subr.bf16.mxu0 0
    %308 = vmatpush2.bf16.msra.mxu0 0
    %309 = vmatprep.subr.bf16.mxu0 0
    %310 = vmatpush2.bf16.msra.mxu0 0
    %311 = vmatprep.subr.bf16.mxu0 0
    %312 = vmatpush2.bf16.msra.mxu0 0
    %313 = vmatprep.subr.bf16.mxu0 0
    %314 = vmatpush2.bf16.msra.mxu0 0
    %315 = vmatprep.subr.bf16.mxu0 0
    %316 = vmatpush2.bf16.msra.mxu0 0
    %317 = vmatprep.subr.bf16.mxu0 0
    %318 = vmatpush2.bf16.msra.mxu0 0
    %319 = vmatprep.mubr.bf16.mxu0 0
    %320 = vmatmul.mubr.bf16.gmra.mxu0 %v285
    %v321 = vpop.f32.mrf.mxu0
    %v322 = vadd.f32 0.0, %v321
    %v323 = vpop.f32.mrf.mxu0
    %v324 = vadd.f32 0.0, %v323
    %v325 = vpop.f32.mrf.mxu0
    %v326 = vpop.f32.mrf.mxu0
    %327 = vdwg.mxu0
    %v330 = vcombine.low %v322, %v324
    %v332 = vunpack.c.l.s4 1983009808
    %v333 = vunpack.c.0.s8 %v332
    %v334 = vlaneseq
    %v335 = vshrl.u32 %v334, 7
    %v336 = vsub.s32 %v333, %v335
    %v337 = vrot.slane %v330, %v336
    %v339 = vadd.f32 %v282, %v337
    %v340 = vxor.u32 %v339, 2147483648
    %v341 = vmul.f32 %v340, 1.442695
    %v342 = vpow.pop %v341
    %v343 = vadd.f32 %v342, 1.0
    %v344 = vrcp.pop %v343
    %v345 = vmul.f32 1.0, %v344
    %v347 = vrot.slane %v339, 2
    %v349 = vtanh.pop %v347
    %350 = vrot.lane.b32.xlu0 %v339, 64
    %v351 = vpop.permute.xlu0 %350
    %v352 = vrot.slane %v351, 2
    %v354 = vxor.u32 %v352, 2147483648
    %v355 = vmul.f32 %v354, 1.442695
    %v356 = vpow.pop %v355
    %v357 = vadd.f32 %v356, 1.0
    %v358 = vrcp.pop %v357
    %v359 = vmul.f32 1.0, %v358
    %v360 = vmul.f32 %v345, %v268
    %v361 = vmul.f32 %v345, %v349
    %363 = vrot.lane.b32.xlu0 %v361, 64
    %v364 = vpop.permute.xlu0 %363
    %v366 = vadd.f32 %v360, %v364
    %v367 = vtanh.pop %v366
    %369 = vrot.lane.b32.xlu0 %v367, 64
    %v370 = vpop.permute.xlu0 %369
    %v372 = vmul.f32 %v359, %v370
    %373 = vst.msk [vmem:[#allocation2 + $0x2] sm:$0x3] %vm275, %v372
    %374 = vst.msk [vmem:[#allocation2 + $0xc] sm:$0x3] %vm277, %v372
    %v375 = vcombine.high %v113, %v115
    %v377 = vunpack.c.l.s4 1983009808
    %v378 = vunpack.c.0.s8 %v377
    %v379 = vlaneseq
    %v380 = vshrl.u32 %v379, 7
    %v381 = vsub.s32 %v378, %v380
    %v382 = vrot.slane %v375, %v381
    %v384 = vcombine.low %v117, %v119
    %v386 = vunpack.c.l.s4 1983009808
    %v387 = vunpack.c.0.s8 %v386
    %v388 = vlaneseq
    %v389 = vshrl.u32 %v388, 7
    %v390 = vsub.s32 %v387, %v389
    %v391 = vrot.slane %v384, %v390
    %v392 = vcombine.high %v391, %v391
    %v394 = vsel %vm37, %v382, %v392
    %v395 = vpack.c.bf16 %v372, %v372
    %v397 = vsel %vm185, %v395, 0
    %399 = vmatprep.subr.bf16.mxu0 0
    %400 = vmatpush1.bf16.msra.mxu0 0
    %401 = vmatprep.subr.bf16.mxu0 0
    %402 = vmatpush1.bf16.msra.mxu0 0
    %403 = vmatprep.subr.bf16.mxu0 0
    %404 = vmatpush1.bf16.msra.mxu0 0
    %405 = vmatprep.subr.bf16.mxu0 0
    %406 = vmatpush1.bf16.msra.mxu0 0
    %407 = vmatprep.subr.bf16.mxu0 %v176
    %408 = vmatpush1.bf16.msra.mxu0 %v175
    %409 = vmatprep.subr.bf16.mxu0 %v174
    %410 = vmatpush1.bf16.msra.mxu0 %v173
    %411 = vmatprep.subr.bf16.mxu0 %v172
    %412 = vmatpush1.bf16.msra.mxu0 %v171
    %413 = vmatprep.subr.bf16.mxu0 %v170
    %414 = vmatpush1.bf16.msra.mxu0 %v169
    %415 = vmatprep.subr.bf16.mxu0 0
    %416 = vmatpush2.bf16.msra.mxu0 0
    %417 = vmatprep.subr.bf16.mxu0 0
    %418 = vmatpush2.bf16.msra.mxu0 0
    %419 = vmatprep.subr.bf16.mxu0 0
    %420 = vmatpush2.bf16.msra.mxu0 0
    %421 = vmatprep.subr.bf16.mxu0 0
    %422 = vmatpush2.bf16.msra.mxu0 0
    %423 = vmatprep.subr.bf16.mxu0 0
    %424 = vmatpush2.bf16.msra.mxu0 0
    %425 = vmatprep.subr.bf16.mxu0 0
    %426 = vmatpush2.bf16.msra.mxu0 0
    %427 = vmatprep.subr.bf16.mxu0 0
    %428 = vmatpush2.bf16.msra.mxu0 0
    %429 = vmatprep.subr.bf16.mxu0 0
    %430 = vmatpush2.bf16.msra.mxu0 0
    %431 = vmatprep.mubr.bf16.mxu0 0
    %432 = vmatmul.mubr.bf16.gmra.mxu0 %v397
    %v433 = vpop.f32.mrf.mxu0
    %v434 = vadd.f32 0.0, %v433
    %v435 = vpop.f32.mrf.mxu0
    %v436 = vadd.f32 0.0, %v435
    %v437 = vpop.f32.mrf.mxu0
    %v438 = vpop.f32.mrf.mxu0
    %439 = vdwg.mxu0
    %v442 = vcombine.low %v434, %v436
    %v444 = vunpack.c.l.s4 1983009808
    %v445 = vunpack.c.0.s8 %v444
    %v446 = vlaneseq
    %v447 = vshrl.u32 %v446, 7
    %v448 = vsub.s32 %v445, %v447
    %v449 = vrot.slane %v442, %v448
    %v451 = vadd.f32 %v394, %v449
    %v452 = vxor.u32 %v451, 2147483648
    %v453 = vmul.f32 %v452, 1.442695
    %v454 = vpow.pop %v453
    %v455 = vadd.f32 %v454, 1.0
    %v456 = vrcp.pop %v455
    %v457 = vmul.f32 1.0, %v456
    %v459 = vrot.slane %v451, 2
    %v461 = vtanh.pop %v459
    %462 = vrot.lane.b32.xlu0 %v451, 64
    %v463 = vpop.permute.xlu0 %462
    %v464 = vrot.slane %v463, 2
    %v466 = vxor.u32 %v464, 2147483648
    %v467 = vmul.f32 %v466, 1.442695
    %v468 = vpow.pop %v467
    %v469 = vadd.f32 %v468, 1.0
    %v470 = vrcp.pop %v469
    %v471 = vmul.f32 1.0, %v470
    %v472 = vmul.f32 %v457, %v366
    %v473 = vmul.f32 %v457, %v461
    %475 = vrot.lane.b32.xlu0 %v473, 64
    %v476 = vpop.permute.xlu0 %475
    %v478 = vadd.f32 %v472, %v476
    %v479 = vtanh.pop %v478
    %481 = vrot.lane.b32.xlu0 %v479, 64
    %v482 = vpop.permute.xlu0 %481
    %v484 = vmul.f32 %v471, %v482
    %485 = vst.msk [vmem:[#allocation2 + $0x4] sm:$0x3] %vm275, %v484
    %486 = vst.msk [vmem:[#allocation2 + $0xa] sm:$0x3] %vm277, %v484
    %v487 = vcombine.high %v382, %v382
    %v490 = vsel %vm37, %v487, %v391
    %v491 = vpack.c.bf16 %v484, %v484
    %v493 = vsel %vm185, %v491, 0
    %495 = vmatprep.subr.bf16.mxu0 0
    %496 = vmatpush1.bf16.msra.mxu0 0
    %497 = vmatprep.subr.bf16.mxu0 0
    %498 = vmatpush1.bf16.msra.mxu0 0
    %499 = vmatprep.subr.bf16.mxu0 0
    %500 = vmatpush1.bf16.msra.mxu0 0
    %501 = vmatprep.subr.bf16.mxu0 0
    %502 = vmatpush1.bf16.msra.mxu0 0
    %503 = vmatprep.subr.bf16.mxu0 %v176
    %504 = vmatpush1.bf16.msra.mxu0 %v175
    %505 = vmatprep.subr.bf16.mxu0 %v174
    %506 = vmatpush1.bf16.msra.mxu0 %v173
    %507 = vmatprep.subr.bf16.mxu0 %v172
    %508 = vmatpush1.bf16.msra.mxu0 %v171
    %509 = vmatprep.subr.bf16.mxu0 %v170
    %510 = vmatpush1.bf16.msra.mxu0 %v169
    %511 = vmatprep.subr.bf16.mxu0 0
    %512 = vmatpush2.bf16.msra.mxu0 0
    %513 = vmatprep.subr.bf16.mxu0 0
    %514 = vmatpush2.bf16.msra.mxu0 0
    %515 = vmatprep.subr.bf16.mxu0 0
    %516 = vmatpush2.bf16.msra.mxu0 0
    %517 = vmatprep.subr.bf16.mxu0 0
    %518 = vmatpush2.bf16.msra.mxu0 0
    %519 = vmatprep.subr.bf16.mxu0 0
    %520 = vmatpush2.bf16.msra.mxu0 0
    %521 = vmatprep.subr.bf16.mxu0 0
    %522 = vmatpush2.bf16.msra.mxu0 0
    %523 = vmatprep.subr.bf16.mxu0 0
    %524 = vmatpush2.bf16.msra.mxu0 0
    %525 = vmatprep.subr.bf16.mxu0 0
    %526 = vmatpush2.bf16.msra.mxu0 0
    %527 = vmatprep.mubr.bf16.mxu0 0
    %528 = vmatmul.mubr.bf16.gmra.mxu0 %v493
    %v529 = vpop.f32.mrf.mxu0
    %v530 = vadd.f32 0.0, %v529
    %v531 = vpop.f32.mrf.mxu0
    %v532 = vadd.f32 0.0, %v531
    %v533 = vpop.f32.mrf.mxu0
    %v534 = vpop.f32.mrf.mxu0
    %535 = vdwg.mxu0
    %v538 = vcombine.low %v530, %v532
    %v540 = vunpack.c.l.s4 1983009808
    %v541 = vunpack.c.0.s8 %v540
    %v542 = vlaneseq
    %v543 = vshrl.u32 %v542, 7
    %v544 = vsub.s32 %v541, %v543
    %v545 = vrot.slane %v538, %v544
    %v547 = vadd.f32 %v490, %v545
    %v548 = vxor.u32 %v547, 2147483648
    %v549 = vmul.f32 %v548, 1.442695
    %v550 = vpow.pop %v549
    %v551 = vadd.f32 %v550, 1.0
    %v552 = vrcp.pop %v551
    %v553 = vmul.f32 1.0, %v552
    %v555 = vrot.slane %v547, 2
    %v557 = vtanh.pop %v555
    %558 = vrot.lane.b32.xlu0 %v547, 64
    %v559 = vpop.permute.xlu0 %558
    %v560 = vrot.slane %v559, 2
    %v562 = vxor.u32 %v560, 2147483648
    %v563 = vmul.f32 %v562, 1.442695
    %v564 = vpow.pop %v563
    %v565 = vadd.f32 %v564, 1.0
    %v566 = vrcp.pop %v565
    %v567 = vmul.f32 1.0, %v566
    %v568 = vmul.f32 %v553, %v478
    %v569 = vmul.f32 %v553, %v557
    %571 = vrot.lane.b32.xlu0 %v569, 64
    %v572 = vpop.permute.xlu0 %571
    %v574 = vadd.f32 %v568, %v572
    %v575 = vtanh.pop %v574
    %577 = vrot.lane.b32.xlu0 %v575, 64
    %v578 = vpop.permute.xlu0 %577
    %v580 = vmul.f32 %v567, %v578
    %581 = vst.msk [vmem:[#allocation2 + $0x6] sm:$0x3] %vm275, %v580
    %582 = vst.msk [vmem:[#allocation2 + $0x8] sm:$0x3] %vm277, %v580
    %v583 = vsel %vm37, %v391, %v487
    %v584 = vpack.c.bf16 %v580, %v580
    %v586 = vsel %vm185, %v584, 0
    %588 = vmatprep.subr.bf16.mxu0 0
    %589 = vmatpush1.bf16.msra.mxu0 0
    %590 = vmatprep.subr.bf16.mxu0 0
    %591 = vmatpush1.bf16.msra.mxu0 0
    %592 = vmatprep.subr.bf16.mxu0 0
    %593 = vmatpush1.bf16.msra.mxu0 0
    %594 = vmatprep.subr.bf16.mxu0 0
    %595 = vmatpush1.bf16.msra.mxu0 0
    %596 = vmatprep.subr.bf16.mxu0 %v176
    %597 = vmatpush1.bf16.msra.mxu0 %v175
    %598 = vmatprep.subr.bf16.mxu0 %v174
    %599 = vmatpush1.bf16.msra.mxu0 %v173
    %600 = vmatprep.subr.bf16.mxu0 %v172
    %601 = vmatpush1.bf16.msra.mxu0 %v171
    %602 = vmatprep.subr.bf16.mxu0 %v170
    %603 = vmatpush1.bf16.msra.mxu0 %v169
    %604 = vmatprep.subr.bf16.mxu0 0
    %605 = vmatpush2.bf16.msra.mxu0 0
    %606 = vmatprep.subr.bf16.mxu0 0
    %607 = vmatpush2.bf16.msra.mxu0 0
    %608 = vmatprep.subr.bf16.mxu0 0
    %609 = vmatpush2.bf16.msra.mxu0 0
    %610 = vmatprep.subr.bf16.mxu0 0
    %611 = vmatpush2.bf16.msra.mxu0 0
    %612 = vmatprep.subr.bf16.mxu0 0
    %613 = vmatpush2.bf16.msra.mxu0 0
    %614 = vmatprep.subr.bf16.mxu0 0
    %615 = vmatpush2.bf16.msra.mxu0 0
    %616 = vmatprep.subr.bf16.mxu0 0
    %617 = vmatpush2.bf16.msra.mxu0 0
    %618 = vmatprep.subr.bf16.mxu0 0
    %619 = vmatpush2.bf16.msra.mxu0 0
    %620 = vmatprep.mubr.bf16.mxu0 0
    %621 = vmatmul.mubr.bf16.gmra.mxu0 %v586
    %v622 = vpop.f32.mrf.mxu0
    %v623 = vadd.f32 0.0, %v622
    %v624 = vpop.f32.mrf.mxu0
    %v625 = vadd.f32 0.0, %v624
    %v626 = vpop.f32.mrf.mxu0
    %v627 = vpop.f32.mrf.mxu0
    %628 = vdwg.mxu0
    %v631 = vcombine.low %v623, %v625
    %v633 = vunpack.c.l.s4 1983009808
    %v634 = vunpack.c.0.s8 %v633
    %v635 = vlaneseq
    %v636 = vshrl.u32 %v635, 7
    %v637 = vsub.s32 %v634, %v636
    %v638 = vrot.slane %v631, %v637
    %v640 = vadd.f32 %v583, %v638
    %v641 = vxor.u32 %v640, 2147483648
    %v642 = vmul.f32 %v641, 1.442695
    %v643 = vpow.pop %v642
    %v644 = vadd.f32 %v643, 1.0
    %v645 = vrcp.pop %v644
    %v646 = vmul.f32 1.0, %v645
    %v648 = vrot.slane %v640, 2
    %v650 = vtanh.pop %v648
    %651 = vrot.lane.b32.xlu0 %v640, 64
    %v652 = vpop.permute.xlu0 %651
    %v653 = vrot.slane %v652, 2
    %v655 = vxor.u32 %v653, 2147483648
    %v656 = vmul.f32 %v655, 1.442695
    %v657 = vpow.pop %v656
    %v658 = vadd.f32 %v657, 1.0
    %v659 = vrcp.pop %v658
    %v660 = vmul.f32 1.0, %v659
    %v661 = vmul.f32 %v646, %v574
    %v662 = vmul.f32 %v646, %v650
    %664 = vrot.lane.b32.xlu0 %v662, 64
    %v665 = vpop.permute.xlu0 %664
    %v667 = vadd.f32 %v661, %v665
    %v668 = vtanh.pop %v667
    %670 = vrot.lane.b32.xlu0 %v668, 64
    %v671 = vpop.permute.xlu0 %670
    %v673 = vmul.f32 %v660, %v671
    %674 = vst.msk [vmem:[#allocation2 + $0x8] sm:$0x3] %vm275, %v673
    %675 = vst.msk [vmem:[#allocation2 + $0x6] sm:$0x3] %vm277, %v673
    %v676 = vsel %vm37, %v392, %v382
    %v677 = vpack.c.bf16 %v673, %v673
    %v679 = vsel %vm185, %v677, 0
    %681 = vmatprep.subr.bf16.mxu0 0
    %682 = vmatpush1.bf16.msra.mxu0 0
    %683 = vmatprep.subr.bf16.mxu0 0
    %684 = vmatpush1.bf16.msra.mxu0 0
    %685 = vmatprep.subr.bf16.mxu0 0
    %686 = vmatpush1.bf16.msra.mxu0 0
    %687 = vmatprep.subr.bf16.mxu0 0
    %688 = vmatpush1.bf16.msra.mxu0 0
    %689 = vmatprep.subr.bf16.mxu0 %v176
    %690 = vmatpush1.bf16.msra.mxu0 %v175
    %691 = vmatprep.subr.bf16.mxu0 %v174
    %692 = vmatpush1.bf16.msra.mxu0 %v173
    %693 = vmatprep.subr.bf16.mxu0 %v172
    %694 = vmatpush1.bf16.msra.mxu0 %v171
    %695 = vmatprep.subr.bf16.mxu0 %v170
    %696 = vmatpush1.bf16.msra.mxu0 %v169
    %697 = vmatprep.subr.bf16.mxu0 0
    %698 = vmatpush2.bf16.msra.mxu0 0
    %699 = vmatprep.subr.bf16.mxu0 0
    %700 = vmatpush2.bf16.msra.mxu0 0
    %701 = vmatprep.subr.bf16.mxu0 0
    %702 = vmatpush2.bf16.msra.mxu0 0
    %703 = vmatprep.subr.bf16.mxu0 0
    %704 = vmatpush2.bf16.msra.mxu0 0
    %705 = vmatprep.subr.bf16.mxu0 0
    %706 = vmatpush2.bf16.msra.mxu0 0
    %707 = vmatprep.subr.bf16.mxu0 0
    %708 = vmatpush2.bf16.msra.mxu0 0
    %709 = vmatprep.subr.bf16.mxu0 0
    %710 = vmatpush2.bf16.msra.mxu0 0
    %711 = vmatprep.subr.bf16.mxu0 0
    %712 = vmatpush2.bf16.msra.mxu0 0
    %713 = vmatprep.mubr.bf16.mxu0 0
    %714 = vmatmul.mubr.bf16.gmra.mxu0 %v679
    %v715 = vpop.f32.mrf.mxu0
    %v716 = vadd.f32 0.0, %v715
    %v717 = vpop.f32.mrf.mxu0
    %v718 = vadd.f32 0.0, %v717
    %v719 = vpop.f32.mrf.mxu0
    %v720 = vpop.f32.mrf.mxu0
    %721 = vdwg.mxu0
    %v724 = vcombine.low %v716, %v718
    %v726 = vunpack.c.l.s4 1983009808
    %v727 = vunpack.c.0.s8 %v726
    %v728 = vlaneseq
    %v729 = vshrl.u32 %v728, 7
    %v730 = vsub.s32 %v727, %v729
    %v731 = vrot.slane %v724, %v730
    %v733 = vadd.f32 %v676, %v731
    %v734 = vxor.u32 %v733, 2147483648
    %v735 = vmul.f32 %v734, 1.442695
    %v736 = vpow.pop %v735
    %v737 = vadd.f32 %v736, 1.0
    %v738 = vrcp.pop %v737
    %v739 = vmul.f32 1.0, %v738
    %v741 = vrot.slane %v733, 2
    %v743 = vtanh.pop %v741
    %744 = vrot.lane.b32.xlu0 %v733, 64
    %v745 = vpop.permute.xlu0 %744
    %v746 = vrot.slane %v745, 2
    %v748 = vxor.u32 %v746, 2147483648
    %v749 = vmul.f32 %v748, 1.442695
    %v750 = vpow.pop %v749
    %v751 = vadd.f32 %v750, 1.0
    %v752 = vrcp.pop %v751
    %v753 = vmul.f32 1.0, %v752
    %v754 = vmul.f32 %v739, %v667
    %v755 = vmul.f32 %v739, %v743
    %757 = vrot.lane.b32.xlu0 %v755, 64
    %v758 = vpop.permute.xlu0 %757
    %v760 = vadd.f32 %v754, %v758
    %v761 = vtanh.pop %v760
    %763 = vrot.lane.b32.xlu0 %v761, 64
    %v764 = vpop.permute.xlu0 %763
    %v766 = vmul.f32 %v753, %v764
    %767 = vst.msk [vmem:[#allocation2 + $0xa] sm:$0x3] %vm275, %v766
    %768 = vst.msk [vmem:[#allocation2 + $0x4] sm:$0x3] %vm277, %v766
    %v769 = vsel %vm37, %v141, %v279
    %v770 = vpack.c.bf16 %v766, %v766
    %v772 = vsel %vm185, %v770, 0
    %774 = vmatprep.subr.bf16.mxu0 0
    %775 = vmatpush1.bf16.msra.mxu0 0
    %776 = vmatprep.subr.bf16.mxu0 0
    %777 = vmatpush1.bf16.msra.mxu0 0
    %778 = vmatprep.subr.bf16.mxu0 0
    %779 = vmatpush1.bf16.msra.mxu0 0
    %780 = vmatprep.subr.bf16.mxu0 0
    %781 = vmatpush1.bf16.msra.mxu0 0
    %782 = vmatprep.subr.bf16.mxu0 %v176
    %783 = vmatpush1.bf16.msra.mxu0 %v175
    %784 = vmatprep.subr.bf16.mxu0 %v174
    %785 = vmatpush1.bf16.msra.mxu0 %v173
    %786 = vmatprep.subr.bf16.mxu0 %v172
    %787 = vmatpush1.bf16.msra.mxu0 %v171
    %788 = vmatprep.subr.bf16.mxu0 %v170
    %789 = vmatpush1.bf16.msra.mxu0 %v169
    %790 = vmatprep.subr.bf16.mxu0 0
    %791 = vmatpush2.bf16.msra.mxu0 0
    %792 = vmatprep.subr.bf16.mxu0 0
    %793 = vmatpush2.bf16.msra.mxu0 0
    %794 = vmatprep.subr.bf16.mxu0 0
    %795 = vmatpush2.bf16.msra.mxu0 0
    %796 = vmatprep.subr.bf16.mxu0 0
    %797 = vmatpush2.bf16.msra.mxu0 0
    %798 = vmatprep.subr.bf16.mxu0 0
    %799 = vmatpush2.bf16.msra.mxu0 0
    %800 = vmatprep.subr.bf16.mxu0 0
    %801 = vmatpush2.bf16.msra.mxu0 0
    %802 = vmatprep.subr.bf16.mxu0 0
    %803 = vmatpush2.bf16.msra.mxu0 0
    %804 = vmatprep.subr.bf16.mxu0 0
    %805 = vmatpush2.bf16.msra.mxu0 0
    %806 = vmatprep.mubr.bf16.mxu0 0
    %807 = vmatmul.mubr.bf16.gmra.mxu0 %v772
    %v808 = vpop.f32.mrf.mxu0
    %v809 = vadd.f32 0.0, %v808
    %v810 = vpop.f32.mrf.mxu0
    %v811 = vadd.f32 0.0, %v810
    %v812 = vpop.f32.mrf.mxu0
    %v813 = vpop.f32.mrf.mxu0
    %814 = vdwg.mxu0
    %v817 = vcombine.low %v809, %v811
    %v819 = vunpack.c.l.s4 1983009808
    %v820 = vunpack.c.0.s8 %v819
    %v821 = vlaneseq
    %v822 = vshrl.u32 %v821, 7
    %v823 = vsub.s32 %v820, %v822
    %v824 = vrot.slane %v817, %v823
    %v826 = vadd.f32 %v769, %v824
    %v827 = vxor.u32 %v826, 2147483648
    %v828 = vmul.f32 %v827, 1.442695
    %v829 = vpow.pop %v828
    %v830 = vadd.f32 %v829, 1.0
    %v831 = vrcp.pop %v830
    %v832 = vmul.f32 1.0, %v831
    %v834 = vrot.slane %v826, 2
    %v836 = vtanh.pop %v834
    %837 = vrot.lane.b32.xlu0 %v826, 64
    %v838 = vpop.permute.xlu0 %837
    %v839 = vrot.slane %v838, 2
    %v841 = vxor.u32 %v839, 2147483648
    %v842 = vmul.f32 %v841, 1.442695
    %v843 = vpow.pop %v842
    %v844 = vadd.f32 %v843, 1.0
    %v845 = vrcp.pop %v844
    %v846 = vmul.f32 1.0, %v845
    %v847 = vmul.f32 %v832, %v760
    %v848 = vmul.f32 %v832, %v836
    %850 = vrot.lane.b32.xlu0 %v848, 64
    %v851 = vpop.permute.xlu0 %850
    %v853 = vadd.f32 %v847, %v851
    %v854 = vtanh.pop %v853
    %856 = vrot.lane.b32.xlu0 %v854, 64
    %v857 = vpop.permute.xlu0 %856
    %v859 = vmul.f32 %v846, %v857
    %860 = vst.msk [vmem:[#allocation2 + $0xc] sm:$0x3] %vm275, %v859
    %861 = vst.msk [vmem:[#allocation2 + $0x2] sm:$0x3] %vm277, %v859
    %v862 = vsel %vm37, %v142, %v130
    %v863 = vpack.c.bf16 %v859, %v859
    %v865 = vsel %vm185, %v863, 0
    %867 = vmatprep.subr.bf16.mxu0 0
    %868 = vmatpush1.bf16.msra.mxu0 0
    %869 = vmatprep.subr.bf16.mxu0 0
    %870 = vmatpush1.bf16.msra.mxu0 0
    %871 = vmatprep.subr.bf16.mxu0 0
    %872 = vmatpush1.bf16.msra.mxu0 0
    %873 = vmatprep.subr.bf16.mxu0 0
    %874 = vmatpush1.bf16.msra.mxu0 0
    %875 = vmatprep.subr.bf16.mxu0 %v176
    %876 = vmatpush1.bf16.msra.mxu0 %v175
    %877 = vmatprep.subr.bf16.mxu0 %v174
    %878 = vmatpush1.bf16.msra.mxu0 %v173
    %879 = vmatprep.subr.bf16.mxu0 %v172
    %880 = vmatpush1.bf16.msra.mxu0 %v171
    %881 = vmatprep.subr.bf16.mxu0 %v170
    %882 = vmatpush1.bf16.msra.mxu0 %v169
    %883 = vmatprep.subr.bf16.mxu0 0
    %884 = vmatpush2.bf16.msra.mxu0 0
    %885 = vmatprep.subr.bf16.mxu0 0
    %886 = vmatpush2.bf16.msra.mxu0 0
    %887 = vmatprep.subr.bf16.mxu0 0
    %888 = vmatpush2.bf16.msra.mxu0 0
    %889 = vmatprep.subr.bf16.mxu0 0
    %890 = vmatpush2.bf16.msra.mxu0 0
    %891 = vmatprep.subr.bf16.mxu0 0
    %892 = vmatpush2.bf16.msra.mxu0 0
    %893 = vmatprep.subr.bf16.mxu0 0
    %894 = vmatpush2.bf16.msra.mxu0 0
    %895 = vmatprep.subr.bf16.mxu0 0
    %896 = vmatpush2.bf16.msra.mxu0 0
    %897 = vmatprep.subr.bf16.mxu0 0
    %898 = vmatpush2.bf16.msra.mxu0 0
    %899 = vmatprep.mubr.bf16.mxu0 0
    %900 = vmatmul.mubr.bf16.gmra.mxu0 %v865
    %v901 = vpop.f32.mrf.mxu0
    %v902 = vadd.f32 0.0, %v901
    %v903 = vpop.f32.mrf.mxu0
    %v904 = vadd.f32 0.0, %v903
    %v905 = vpop.f32.mrf.mxu0
    %v906 = vpop.f32.mrf.mxu0
    %907 = vdwg.mxu0
    %v910 = vcombine.low %v902, %v904
    %v912 = vunpack.c.l.s4 1983009808
    %v913 = vunpack.c.0.s8 %v912
    %v914 = vlaneseq
    %v915 = vshrl.u32 %v914, 7
    %v916 = vsub.s32 %v913, %v915
    %v917 = vrot.slane %v910, %v916
    %v919 = vadd.f32 %v862, %v917
    %v920 = vxor.u32 %v919, 2147483648
    %v921 = vmul.f32 %v920, 1.442695
    %v922 = vpow.pop %v921
    %v923 = vadd.f32 %v922, 1.0
    %v924 = vrcp.pop %v923
    %v925 = vmul.f32 1.0, %v924
    %v927 = vrot.slane %v919, 2
    %v929 = vtanh.pop %v927
    %930 = vrot.lane.b32.xlu0 %v919, 64
    %v931 = vpop.permute.xlu0 %930
    %v932 = vrot.slane %v931, 2
    %v934 = vxor.u32 %v932, 2147483648
    %v935 = vmul.f32 %v934, 1.442695
    %v936 = vpow.pop %v935
    %v937 = vadd.f32 %v936, 1.0
    %v938 = vrcp.pop %v937
    %v939 = vmul.f32 1.0, %v938
    %v940 = vmul.f32 %v925, %v853
    %v941 = vmul.f32 %v925, %v929
    %943 = vrot.lane.b32.xlu0 %v941, 64
    %v944 = vpop.permute.xlu0 %943
    %v946 = vadd.f32 %v940, %v944
    %v947 = vtanh.pop %v946
    %949 = vrot.lane.b32.xlu0 %v947, 64
    %v950 = vpop.permute.xlu0 %949
    %v952 = vmul.f32 %v939, %v950
    %953 = vst.msk [vmem:[#allocation2 + $0xe] sm:$0x3] %vm275, %v952
    %954 = vst.msk [vmem:[#allocation2] sm:$0x3] %vm277, %v952
    %v955 = vld [vmem:[#allocation2] sm:$0xff]
    %v956 = vld [vmem:[#allocation2 + $0x8] sm:$0xff]
    %v957 = vpack.c.bf16 %v956, %v955
    %v958 = vld [vmem:[%s5] sm:$0xf]
    %v959 = vld [vmem:[%s5 + $0x4] sm:$0xf]
    %v960 = vld [vmem:[%s5 + $0x8] sm:$0xf]
    %v961 = vld [vmem:[%s5 + $0xc] sm:$0xf]
    %v962 = vld [vmem:[%s5 + $0x10] sm:$0xf]
    %v963 = vld [vmem:[%s5 + $0x14] sm:$0xf]
    %v964 = vld [vmem:[%s5 + $0x18] sm:$0xf]
    %v965 = vld [vmem:[%s5 + $0x1c] sm:$0xf]
    %v966 = vld [vmem:[%s6] sm:$0x1]
    %v968 = vlaneseq
    %v969 = vshrl.u32 %v968, 7
    %v970 = vsub.s32 0, %v969
    %v971 = vrot.slane %v966, %v970
    %v981 = vunpack.c.l.b16 %v958
    %v982 = vunpack.c.l.b16 %v959
    %v983 = vunpack.c.l.b16 %v960
    %v984 = vunpack.c.l.b16 %v961
    %v985 = vunpack.c.l.b16 %v962
    %v986 = vunpack.c.l.b16 %v963
    %v987 = vunpack.c.l.b16 %v964
    %v988 = vunpack.c.l.b16 %v965
    %v989 = vpack.c.b16 %v982, %v981
    %v990 = vpack.c.b16 %v984, %v983
    %v991 = vpack.c.b16 %v986, %v985
    %v992 = vpack.c.b16 %v988, %v987
    %v998 = vsel %vm185, %v957, 0
    %1000 = vmatprep.subr.bf16.mxu0 0
    %1001 = vmatpush1.bf16.msra.mxu0 0
    %1002 = vmatprep.subr.bf16.mxu0 0
    %1003 = vmatpush1.bf16.msra.mxu0 0
    %1004 = vmatprep.subr.bf16.mxu0 0
    %1005 = vmatpush1.bf16.msra.mxu0 0
    %1006 = vmatprep.subr.bf16.mxu0 0
    %1007 = vmatpush1.bf16.msra.mxu0 0
    %1008 = vmatprep.subr.bf16.mxu0 0
    %1009 = vmatpush1.bf16.msra.mxu0 %v992
    %1010 = vmatprep.subr.bf16.mxu0 0
    %1011 = vmatpush1.bf16.msra.mxu0 %v991
    %1012 = vmatprep.subr.bf16.mxu0 0
    %1013 = vmatpush1.bf16.msra.mxu0 %v990
    %1014 = vmatprep.subr.bf16.mxu0 0
    %1015 = vmatpush1.bf16.msra.mxu0 %v989
    %1016 = vmatprep.subr.bf16.mxu0 0
    %1017 = vmatpush2.bf16.msra.mxu0 0
    %1018 = vmatprep.subr.bf16.mxu0 0
    %1019 = vmatpush2.bf16.msra.mxu0 0
    %1020 = vmatprep.subr.bf16.mxu0 0
    %1021 = vmatpush2.bf16.msra.mxu0 0
    %1022 = vmatprep.subr.bf16.mxu0 0
    %1023 = vmatpush2.bf16.msra.mxu0 0
    %1024 = vmatprep.subr.bf16.mxu0 0
    %1025 = vmatpush2.bf16.msra.mxu0 0
    %1026 = vmatprep.subr.bf16.mxu0 0
    %1027 = vmatpush2.bf16.msra.mxu0 0
    %1028 = vmatprep.subr.bf16.mxu0 0
    %1029 = vmatpush2.bf16.msra.mxu0 0
    %1030 = vmatprep.subr.bf16.mxu0 0
    %1031 = vmatpush2.bf16.msra.mxu0 0
    %1032 = vmatprep.mubr.bf16.mxu0 0
    %1033 = vmatmul.mubr.bf16.gmra.mxu0 %v998
    %v1034 = vpop.f32.mrf.mxu0
    %v1035 = vadd.f32 %v971, %v1034
    %v1036 = vpop.f32.mrf.mxu0
    %v1037 = vpop.f32.mrf.mxu0
    %v1038 = vadd.f32 %v971, %v1037
    %v1039 = vpop.f32.mrf.mxu0
    %1040 = vdwg.mxu0
    %v1042 = vrot.slane %v1035, 2
    %v1044 = vmax.f32 %v1035, %v1042
    %v1045 = vrot.slane %v1035, 4
    %v1047 = vmax.f32 %v1044, %v1045
    %v1048 = vrot.slane %v1035, 6
    %v1050 = vmax.f32 %v1047, %v1048
    %v1051 = vmax.f32 %v1050, %v1038
    %v1053 = vrot.slane %v1038, 2
    %v1055 = vmax.f32 %v1051, %v1053
    %v1056 = vrot.slane %v1038, 4
    %v1058 = vmax.f32 %v1055, %v1056
    %v1059 = vrot.slane %v1038, 6
    %v1061 = vmax.f32 %v1058, %v1059
    %1062 = vst.msk [vmem:[#allocation3] sm:$0x3] %vm275, %v1061
    // Predicated region
    $region30: #{lstm_net_forward.1} parent=1 // pred_check
      _
    $region31: #{lstm_net_forward.1} parent=1 // pred_check_branch
      %1064 = sbr.rel (0) target = $region33
    $region32: #{lstm_net_forward.1} parent=1 // pred_region
      %s1066 = ssub.s32 32, 32
      %1067 = vsyncadd [#allocation4], %s1066
      %s1069 = sshll.u32 [#allocation3], 4
      %s1070 = int_to_ptr.vmem [resolvable:$true] %s1069
      %1072 = dma.vmem_to_hbm [thread:$0]  %s1070, 32, %s7, [#allocation4]
    $region33: #{lstm_net_forward.1} parent=1 // pred_fallthru
      _
    // Predicated region
    $region34: #{lstm_net_forward.1} parent=1 // pred_check
      _
    $region35: #{lstm_net_forward.1} parent=1 // pred_check_branch
      %1074 = sbr.rel (0) target = $region37
    $region36: #{lstm_net_forward.1} parent=1 // pred_region
      %1075 = dma.done [#allocation4], 32
    $region37: #{lstm_net_forward.1} parent=1 // pred_fallthru
      _
    %1076 = vsyncpa [#allocation4], 1

</llo_original>
